<compile_context>
chip_gen: v6e
topology: v6e:2x2x1
jax: 0.10.0
libtpu: 0.0.40
codegen_flags: <defaults>
</compile_context>

<pallas_src>
import numpy as np
import jax
import jax.numpy as jnp
from jax import lax
from jax.experimental import pallas as pl
from jax.experimental.pallas import tpu as pltpu

IGNORE = -100  # self.ignore_index


def dual_systems_kernel(params_ref, ar0_ref, ar1_ref,
                        a1_ref, a2_ref, st_ref, rw_ref,
                        o00_ref, o01_ref, o10_ref, o11_ref):
    # params_ref: [5] f32 SMEM = (sigmoid(tau), sigmoid(alpha), sigmoid(lambd),
    #             tanh(stickiness), beta) -- transforms applied in the wrapper.
    # ar0/ar1   : [1, LANE] f32 VMEM  -- per-participant initial action_repeat
    # a1/a2/st  : [T, LANE] i32 VMEM  -- trial-major, participants on lanes
    # rw        : [T, LANE] f32 VMEM
    # o00..o11  : [T, LANE] f32 VMEM  -- logits planes (already scaled by beta)
    T, LANE = a1_ref.shape

    tau = params_ref[0]
    alpha = params_ref[1]
    lam = params_ref[2]
    stick = params_ref[3]
    beta = params_ref[4]

    # Hoisted derived scalars + one-time vreg broadcasts (JAX does not CSE
    # broadcast_in_dim, so broadcast once before the trial loop).
    shp = (1, LANE)

    def bc(s):
        return jnp.full(shp, s, dtype=jnp.float32)

    tau_v = bc(tau)
    omt_v = bc(1.0 - tau)
    alpha_v = bc(alpha)
    lam_alpha_v = bc(lam * alpha)
    beta_v = bc(beta)
    stick_beta_v = bc(stick * beta)
    zero_v = jnp.zeros(shp, jnp.float32)
    one_v = jnp.ones(shp, jnp.float32)

    def trial_body(t, carry):
        q00, q01, q10, q11, q20, q21, ar0, ar1 = carry
        row = pl.ds(t, 1)
        a1 = a1_ref[row, :]
        a2 = a2_ref[row, :]
        s = st_ref[row, :]
        r = rw_ref[row, :]

        # q_mb = transition_matrix @ max(q_mf[1:], dim=1)  -- 4 VPU FMAs, no MXU
        max1 = jnp.maximum(q10, q11)
        max2 = jnp.maximum(q20, q21)
        qmb0 = 0.7 * max1 + 0.3 * max2
        qmb1 = 0.3 * max1 + 0.7 * max2
        qnet0 = tau_v * qmb0 + omt_v * q00
        qnet1 = tau_v * qmb1 + omt_v * q01

        valid1 = a1 != IGNORE
        valid2 = a2 != IGNORE
        do_upd = valid1 & valid2

        s_is0 = s == 0
        a1_is0 = a1 == 0
        a2_is0 = a2 == 0

        # q_mf[state + 1]  (state in {0, 1} -> rows 1 / 2)
        qs0 = jnp.where(s_is0, q10, q20)
        qs1 = jnp.where(s_is0, q11, q21)

        # logits (already scaled by beta == Temperature); skipped trials stay 0
        l00 = jnp.where(valid1, qnet0 * beta_v + ar0 * stick_beta_v, zero_v)
        l01 = jnp.where(valid1, qnet1 * beta_v + ar1 * stick_beta_v, zero_v)
        l10 = jnp.where(valid1, qs0 * beta_v, zero_v)
        l11 = jnp.where(valid1, qs1 * beta_v, zero_v)

        o00_ref[row, :] = l00
        o01_ref[row, :] = l01
        o10_ref[row, :] = l10
        o11_ref[row, :] = l11

        # model-free TD updates (only where both actions are valid)
        q0a1 = jnp.where(a1_is0, q00, q01)
        qsa2 = jnp.where(a2_is0, qs0, qs1)
        delta1 = qsa2 - q0a1
        delta2 = r - qsa2
        q0a1_new = q0a1 + alpha_v * delta1 + lam_alpha_v * delta2
        qsa2_new = qsa2 + alpha_v * delta2

        q00n = jnp.where(do_upd & a1_is0, q0a1_new, q00)
        q01n = jnp.where(do_upd & (~a1_is0), q0a1_new, q01)
        q10n = jnp.where(do_upd & s_is0 & a2_is0, qsa2_new, q10)
        q11n = jnp.where(do_upd & s_is0 & (~a2_is0), qsa2_new, q11)
        q20n = jnp.where(do_upd & (~s_is0) & a2_is0, qsa2_new, q20)
        q21n = jnp.where(do_upd & (~s_is0) & (~a2_is0), qsa2_new, q21)

        # action_repeat refreshes only when action_1 is valid (PyTorch `continue`)
        ar0n = jnp.where(valid1, jnp.where(a1_is0, one_v, zero_v), ar0)
        ar1n = jnp.where(valid1, jnp.where(a1_is0, zero_v, one_v), ar1)
        return (q00n, q01n, q10n, q11n, q20n, q21n, ar0n, ar1n)

    init = (zero_v, zero_v, zero_v, zero_v, zero_v, zero_v,
            ar0_ref[...], ar1_ref[...])
    unroll = T if T <= 8 else 8
    _ = lax.fori_loop(0, T, trial_body, init, unroll=unroll)


def _initial_action_repeat(a1):
    """Per-participant initial action_repeat (cross-participant carry pre-pass)."""
    P, T = a1.shape
    valid = a1 != IGNORE
    has_valid = jnp.any(valid, axis=1)
    t_idx = jnp.arange(T, dtype=jnp.int32)
    last_idx = jnp.max(jnp.where(valid, t_idx[None, :], -1), axis=1)
    last_a1 = jnp.take_along_axis(a1, jnp.maximum(last_idx, 0)[:, None], axis=1)[:, 0]
    last_a1 = jnp.where(has_valid, last_a1, -1)

    def scan_fn(carry, x):
        new = jnp.where(x >= 0, x, carry)
        return new, carry  # output = carry BEFORE this participant

    _, ar_prev = lax.scan(scan_fn, jnp.int32(-1), last_a1)
    ar0 = (ar_prev == 0).astype(jnp.float32)
    ar1 = (ar_prev == 1).astype(jnp.float32)
    return ar0, ar1


def dual_systems_forward(params, a1, a2, st, rw):
    P, T = a1.shape

    ar0, ar1 = _initial_action_repeat(a1)

    # Pad participants up to a multiple of the lane-block size; lay tensors out
    # trial-major [T, P_pad] so every trial reads/writes lane-dense rows.
    p128 = ((P + 127) // 128) * 128
    lane_block = min(p128, 512)
    P_pad = ((P + lane_block - 1) // lane_block) * lane_block
    pad = P_pad - P
    n_blocks = P_pad // lane_block

    def to_tp(x, fill):
        return jnp.transpose(jnp.pad(x, ((0, pad), (0, 0)), constant_values=fill))

    a1_tp = to_tp(a1, IGNORE)   # padded lanes never valid -> logits stay 0
    a2_tp = to_tp(a2, IGNORE)
    st_tp = to_tp(st, 0)
    rw_tp = to_tp(rw, 0.0)
    ar0_p = jnp.pad(ar0, (0, pad))[None, :]
    ar1_p = jnp.pad(ar1, (0, pad))[None, :]

    data_spec = pl.BlockSpec((T, lane_block), lambda i: (0, i))
    ar_spec = pl.BlockSpec((1, lane_block), lambda i: (0, i))

    l00, l01, l10, l11 = pl.pallas_call(
        dual_systems_kernel,
        out_shape=tuple(jax.ShapeDtypeStruct((T, P_pad), jnp.float32)
                        for _ in range(4)),
        grid=(n_blocks,),
        in_specs=[
            pl.BlockSpec(memory_space=pltpu.MemorySpace.SMEM),  # params [5]
            ar_spec, ar_spec,
            data_spec, data_spec, data_spec, data_spec,
        ],
        out_specs=(data_spec, data_spec, data_spec, data_spec),
        compiler_params=pltpu.CompilerParams(
            dimension_semantics=("parallel",)),
    )(params, ar0_p, ar1_p, a1_tp, a2_tp, st_tp, rw_tp)

    # Four lane-dense [T, P_pad] planes -> [P, T, 2, 2]
    logits = jnp.stack([l00, l01, l10, l11], axis=-1)   # [T, P_pad, 4]
    logits = logits.reshape(T, P_pad, 2, 2)
    logits = jnp.transpose(logits, (1, 0, 2, 3))[:P]
    return logits


def reference_forward(tau, alpha, lam, stick, beta, a1, a2, st, rw):
    """NumPy mirror of DualSystems.forward_two_step (for verification)."""
    P, T = a1.shape
    TM = np.array([[0.7, 0.3], [0.3, 0.7]], dtype=np.float32)
    logits = np.zeros((P, T, 2, 2), dtype=np.float32)
    action_repeat = np.zeros(2, dtype=np.float32)
    for p in range(P):
        q_mf = np.zeros((3, 2), dtype=np.float32)
        for t in range(T):
            max_q = q_mf[1:].max(axis=1)
            q_mb = TM @ max_q
            q_net = tau * q_mb + (1.0 - tau) * q_mf[0]
            if a1[p, t] == IGNORE:
                continue
            logits[p, t, 0] = q_net + action_repeat * stick
            logits[p, t, 1] = q_mf[st[p, t] + 1]
            if a2[p, t] != IGNORE:
                delta1 = q_mf[st[p, t] + 1, a2[p, t]] - q_mf[0, a1[p, t]]
                q_mf[0, a1[p, t]] += alpha * delta1
                delta2 = rw[p, t] - q_mf[st[p, t] + 1, a2[p, t]]
                q_mf[st[p, t] + 1, a2[p, t]] += alpha * delta2
                q_mf[0, a1[p, t]] += lam * alpha * delta2
            action_repeat = np.zeros(2, dtype=np.float32)
            action_repeat[a1[p, t]] = 1.0
    return logits * beta


if __name__ == "__main__":
    P, T = 2, 8  # participants, trials
    key = jax.random.PRNGKey(0)
    kc, ks, kr, kp, kb = jax.random.split(key, 5)

    # synthetic `data` dict contents (shapes as the module implies: [P, T, 2])
    choice = jax.random.randint(kc, (P, T, 2), 0, 2).astype(jnp.int32)
    choice = choice.at[0, 3, 0].set(IGNORE)  # missing first-step action
    choice = choice.at[1, 5, 1].set(IGNORE)  # missing second-step action
    current_state = jax.random.randint(ks, (P, T, 2), 0, 2).astype(jnp.int32)
    reward = jax.random.bernoulli(kr, 0.5, (P, T, 2)).astype(jnp.float32)

    # deterministic "parameter" init (matching __init__: 4 x randn + 0.01*randn beta)
    raw = jax.random.normal(kp, (4,), dtype=jnp.float32)
    beta = 0.01 * jax.random.normal(kb, (), dtype=jnp.float32)
    tau = jax.nn.sigmoid(raw[0])
    alpha = jax.nn.sigmoid(raw[1])
    lam = jax.nn.sigmoid(raw[2])
    stick = jnp.tanh(raw[3])
    params = jnp.stack([tau, alpha, lam, stick, beta]).astype(jnp.float32)

    a1 = choice[:, :, 0]
    a2 = choice[:, :, 1]
    st = current_state[:, :, 1]
    rw = reward[:, :, 1]

    logits = jax.jit(dual_systems_forward)(params, a1, a2, st, rw)
    logits = jax.block_until_ready(logits)

    ref = reference_forward(
        float(tau), float(alpha), float(lam), float(stick), float(beta),
        np.asarray(a1), np.asarray(a2), np.asarray(st), np.asarray(rw),
    )
    np.testing.assert_allclose(np.asarray(logits), ref, rtol=1e-5, atol=1e-6)
    print("KERNEL_OK")
</pallas_src>

<mosaic_0001>
module attributes {stable_mosaic.version = 11 : i64} {
  func.func @dual_systems_kernel(%arg0: i32, %arg1: memref<5xf32, #tpu.memory_space<smem>>, %arg2: memref<1x128xf32, #tpu.memory_space<vmem>>, %arg3: memref<1x128xf32, #tpu.memory_space<vmem>>, %arg4: memref<8x128xi32, #tpu.memory_space<vmem>>, %arg5: memref<8x128xi32, #tpu.memory_space<vmem>>, %arg6: memref<8x128xi32, #tpu.memory_space<vmem>>, %arg7: memref<8x128xf32, #tpu.memory_space<vmem>>, %arg8: memref<8x128xf32, #tpu.memory_space<vmem>>, %arg9: memref<8x128xf32, #tpu.memory_space<vmem>>, %arg10: memref<8x128xf32, #tpu.memory_space<vmem>>, %arg11: memref<8x128xf32, #tpu.memory_space<vmem>>) attributes {dimension_semantics = [#tpu.dimension_semantics<parallel>], iteration_bounds = array<i64: 1>, scalar_prefetch = 0 : i64, scratch_operands = 0 : i64, tpu.core_type = #tpu.core_type<tc>, window_params = [{transform_indices = @transform_0, window_bounds = array<i64: 5>}, {transform_indices = @transform_1, window_bounds = array<i64: 1, 128>}, {transform_indices = @transform_2, window_bounds = array<i64: 1, 128>}, {transform_indices = @transform_3, window_bounds = array<i64: 8, 128>}, {transform_indices = @transform_4, window_bounds = array<i64: 8, 128>}, {transform_indices = @transform_5, window_bounds = array<i64: 8, 128>}, {transform_indices = @transform_6, window_bounds = array<i64: 8, 128>}, {transform_indices = @transform_7, window_bounds = array<i64: 8, 128>}, {transform_indices = @transform_8, window_bounds = array<i64: 8, 128>}, {transform_indices = @transform_9, window_bounds = array<i64: 8, 128>}, {transform_indices = @transform_10, window_bounds = array<i64: 8, 128>}]} {
    %c0 = arith.constant 0 : index
    %0 = memref.load %arg1[%c0] : memref<5xf32, #tpu.memory_space<smem>>
    %c1 = arith.constant 1 : index
    %1 = memref.load %arg1[%c1] : memref<5xf32, #tpu.memory_space<smem>>
    %c2 = arith.constant 2 : index
    %2 = memref.load %arg1[%c2] : memref<5xf32, #tpu.memory_space<smem>>
    %c3 = arith.constant 3 : index
    %3 = memref.load %arg1[%c3] : memref<5xf32, #tpu.memory_space<smem>>
    %c4 = arith.constant 4 : index
    %4 = memref.load %arg1[%c4] : memref<5xf32, #tpu.memory_space<smem>>
    %5 = vector.broadcast %0 : f32 to vector<1x128xf32>
    %cst = arith.constant 1.000000e+00 : f32
    %6 = arith.subf %cst, %0 : f32
    %7 = vector.broadcast %6 : f32 to vector<1x128xf32>
    %8 = vector.broadcast %1 : f32 to vector<1x128xf32>
    %9 = arith.mulf %2, %1 : f32
    %10 = vector.broadcast %9 : f32 to vector<1x128xf32>
    %11 = vector.broadcast %4 : f32 to vector<1x128xf32>
    %12 = arith.mulf %3, %4 : f32
    %13 = vector.broadcast %12 : f32 to vector<1x128xf32>
    %cst_0 = arith.constant 0.000000e+00 : f32
    %14 = vector.broadcast %cst_0 : f32 to vector<1x128xf32>
    %cst_1 = arith.constant 1.000000e+00 : f32
    %15 = vector.broadcast %cst_1 : f32 to vector<1x128xf32>
    %c0_2 = arith.constant 0 : index
    %c0_3 = arith.constant 0 : index
    %16 = vector.load %arg2[%c0_2, %c0_3] : memref<1x128xf32, #tpu.memory_space<vmem>>, vector<1x128xf32>
    %c0_4 = arith.constant 0 : index
    %c0_5 = arith.constant 0 : index
    %17 = vector.load %arg3[%c0_4, %c0_5] : memref<1x128xf32, #tpu.memory_space<vmem>>, vector<1x128xf32>
    %c0_i32 = arith.constant 0 : i32
    %18 = arith.index_cast %c0_i32 : i32 to index
    %c0_6 = arith.constant 0 : index
    %19 = vector.load %arg4[%18, %c0_6] : memref<8x128xi32, #tpu.memory_space<vmem>>, vector<1x128xi32>
    %20 = arith.index_cast %c0_i32 : i32 to index
    %c0_7 = arith.constant 0 : index
    %21 = vector.load %arg5[%20, %c0_7] : memref<8x128xi32, #tpu.memory_space<vmem>>, vector<1x128xi32>
    %22 = arith.index_cast %c0_i32 : i32 to index
    %c0_8 = arith.constant 0 : index
    %23 = vector.load %arg6[%22, %c0_8] : memref<8x128xi32, #tpu.memory_space<vmem>>, vector<1x128xi32>
    %24 = arith.index_cast %c0_i32 : i32 to index
    %c0_9 = arith.constant 0 : index
    %25 = vector.load %arg7[%24, %c0_9] : memref<8x128xf32, #tpu.memory_space<vmem>>, vector<1x128xf32>
    %26 = arith.maximumf %14, %14 : vector<1x128xf32>
    %27 = arith.maximumf %14, %14 : vector<1x128xf32>
    %cst_10 = arith.constant 0.699999988 : f32
    %28 = vector.broadcast %cst_10 : f32 to vector<1x128xf32>
    %29 = arith.mulf %28, %26 : vector<1x128xf32>
    %cst_11 = arith.constant 3.000000e-01 : f32
    %30 = vector.broadcast %cst_11 : f32 to vector<1x128xf32>
    %31 = arith.mulf %30, %27 : vector<1x128xf32>
    %32 = arith.addf %29, %31 : vector<1x128xf32>
    %cst_12 = arith.constant 3.000000e-01 : f32
    %33 = vector.broadcast %cst_12 : f32 to vector<1x128xf32>
    %34 = arith.mulf %33, %26 : vector<1x128xf32>
    %cst_13 = arith.constant 0.699999988 : f32
    %35 = vector.broadcast %cst_13 : f32 to vector<1x128xf32>
    %36 = arith.mulf %35, %27 : vector<1x128xf32>
    %37 = arith.addf %34, %36 : vector<1x128xf32>
    %38 = arith.mulf %5, %32 : vector<1x128xf32>
    %39 = arith.mulf %7, %14 : vector<1x128xf32>
    %40 = arith.addf %38, %39 : vector<1x128xf32>
    %41 = arith.mulf %5, %37 : vector<1x128xf32>
    %42 = arith.mulf %7, %14 : vector<1x128xf32>
    %43 = arith.addf %41, %42 : vector<1x128xf32>
    %c-100_i32 = arith.constant -100 : i32
    %44 = vector.broadcast %c-100_i32 : i32 to vector<1x128xi32>
    %45 = arith.cmpi ne, %19, %44 : vector<1x128xi32>
    %c-100_i32_14 = arith.constant -100 : i32
    %46 = vector.broadcast %c-100_i32_14 : i32 to vector<1x128xi32>
    %47 = arith.cmpi ne, %21, %46 : vector<1x128xi32>
    %48 = arith.andi %45, %47 : vector<1x128xi1>
    %c0_i32_15 = arith.constant 0 : i32
    %49 = vector.broadcast %c0_i32_15 : i32 to vector<1x128xi32>
    %50 = arith.cmpi eq, %23, %49 : vector<1x128xi32>
    %c0_i32_16 = arith.constant 0 : i32
    %51 = vector.broadcast %c0_i32_16 : i32 to vector<1x128xi32>
    %52 = arith.cmpi eq, %19, %51 : vector<1x128xi32>
    %c0_i32_17 = arith.constant 0 : i32
    %53 = vector.broadcast %c0_i32_17 : i32 to vector<1x128xi32>
    %54 = arith.cmpi eq, %21, %53 : vector<1x128xi32>
    %55 = arith.select %50, %14, %14 : vector<1x128xi1>, vector<1x128xf32>
    %56 = arith.select %50, %14, %14 : vector<1x128xi1>, vector<1x128xf32>
    %57 = arith.mulf %40, %11 : vector<1x128xf32>
    %58 = arith.mulf %16, %13 : vector<1x128xf32>
    %59 = arith.addf %57, %58 : vector<1x128xf32>
    %60 = arith.select %45, %59, %14 : vector<1x128xi1>, vector<1x128xf32>
    %61 = arith.mulf %43, %11 : vector<1x128xf32>
    %62 = arith.mulf %17, %13 : vector<1x128xf32>
    %63 = arith.addf %61, %62 : vector<1x128xf32>
    %64 = arith.select %45, %63, %14 : vector<1x128xi1>, vector<1x128xf32>
    %65 = arith.mulf %55, %11 : vector<1x128xf32>
    %66 = arith.select %45, %65, %14 : vector<1x128xi1>, vector<1x128xf32>
    %67 = arith.mulf %56, %11 : vector<1x128xf32>
    %68 = arith.select %45, %67, %14 : vector<1x128xi1>, vector<1x128xf32>
    %69 = arith.index_cast %c0_i32 : i32 to index
    %c0_18 = arith.constant 0 : index
    %70 = vector.load %arg8[%69, %c0_18] : memref<8x128xf32, #tpu.memory_space<vmem>>, vector<1x128xf32>
    tpu.vector_store %arg8[%69, %c0_18], %60 {strides = array<i32>} : memref<8x128xf32, #tpu.memory_space<vmem>>, vector<1x128xf32>,
    %71 = arith.index_cast %c0_i32 : i32 to index
    %c0_19 = arith.constant 0 : index
    %72 = vector.load %arg9[%71, %c0_19] : memref<8x128xf32, #tpu.memory_space<vmem>>, vector<1x128xf32>
    tpu.vector_store %arg9[%71, %c0_19], %64 {strides = array<i32>} : memref<8x128xf32, #tpu.memory_space<vmem>>, vector<1x128xf32>,
    %73 = arith.index_cast %c0_i32 : i32 to index
    %c0_20 = arith.constant 0 : index
    %74 = vector.load %arg10[%73, %c0_20] : memref<8x128xf32, #tpu.memory_space<vmem>>, vector<1x128xf32>
    tpu.vector_store %arg10[%73, %c0_20], %66 {strides = array<i32>} : memref<8x128xf32, #tpu.memory_space<vmem>>, vector<1x128xf32>,
    %75 = arith.index_cast %c0_i32 : i32 to index
    %c0_21 = arith.constant 0 : index
    %76 = vector.load %arg11[%75, %c0_21] : memref<8x128xf32, #tpu.memory_space<vmem>>, vector<1x128xf32>
    tpu.vector_store %arg11[%75, %c0_21], %68 {strides = array<i32>} : memref<8x128xf32, #tpu.memory_space<vmem>>, vector<1x128xf32>,
    %77 = arith.select %52, %14, %14 : vector<1x128xi1>, vector<1x128xf32>
    %78 = arith.select %54, %55, %56 : vector<1x128xi1>, vector<1x128xf32>
    %79 = arith.subf %78, %77 : vector<1x128xf32>
    %80 = arith.subf %25, %78 : vector<1x128xf32>
    %81 = arith.mulf %8, %79 : vector<1x128xf32>
    %82 = arith.addf %77, %81 : vector<1x128xf32>
    %83 = arith.mulf %10, %80 : vector<1x128xf32>
    %84 = arith.addf %82, %83 : vector<1x128xf32>
    %85 = arith.mulf %8, %80 : vector<1x128xf32>
    %86 = arith.addf %78, %85 : vector<1x128xf32>
    %87 = arith.andi %48, %52 : vector<1x128xi1>
    %88 = arith.select %87, %84, %14 : vector<1x128xi1>, vector<1x128xf32>
    %cst_22 = arith.constant dense<true> : vector<1x128xi1>
    %89 = arith.xori %52, %cst_22 : vector<1x128xi1>
    %90 = arith.andi %48, %89 : vector<1x128xi1>
    %91 = arith.select %90, %84, %14 : vector<1x128xi1>, vector<1x128xf32>
    %92 = arith.andi %48, %50 : vector<1x128xi1>
    %93 = arith.andi %92, %54 : vector<1x128xi1>
    %94 = arith.select %93, %86, %14 : vector<1x128xi1>, vector<1x128xf32>
    %95 = arith.andi %48, %50 : vector<1x128xi1>
    %cst_23 = arith.constant dense<true> : vector<1x128xi1>
    %96 = arith.xori %54, %cst_23 : vector<1x128xi1>
    %97 = arith.andi %95, %96 : vector<1x128xi1>
    %98 = arith.select %97, %86, %14 : vector<1x128xi1>, vector<1x128xf32>
    %cst_24 = arith.constant dense<true> : vector<1x128xi1>
    %99 = arith.xori %50, %cst_24 : vector<1x128xi1>
    %100 = arith.andi %48, %99 : vector<1x128xi1>
    %101 = arith.andi %100, %54 : vector<1x128xi1>
    %102 = arith.select %101, %86, %14 : vector<1x128xi1>, vector<1x128xf32>
    %cst_25 = arith.constant dense<true> : vector<1x128xi1>
    %103 = arith.xori %50, %cst_25 : vector<1x128xi1>
    %104 = arith.andi %48, %103 : vector<1x128xi1>
    %cst_26 = arith.constant dense<true> : vector<1x128xi1>
    %105 = arith.xori %54, %cst_26 : vector<1x128xi1>
    %106 = arith.andi %104, %105 : vector<1x128xi1>
    %107 = arith.select %106, %86, %14 : vector<1x128xi1>, vector<1x128xf32>
    %108 = arith.select %52, %15, %14 : vector<1x128xi1>, vector<1x128xf32>
    %109 = arith.select %45, %108, %16 : vector<1x128xi1>, vector<1x128xf32>
    %110 = arith.select %52, %14, %15 : vector<1x128xi1>, vector<1x128xf32>
    %111 = arith.select %45, %110, %17 : vector<1x128xi1>, vector<1x128xf32>
    %c1_i32 = arith.constant 1 : i32
    %112 = arith.index_cast %c1_i32 : i32 to index
    %c0_27 = arith.constant 0 : index
    %113 = vector.load %arg4[%112, %c0_27] : memref<8x128xi32, #tpu.memory_space<vmem>>, vector<1x128xi32>
    %114 = arith.index_cast %c1_i32 : i32 to index
    %c0_28 = arith.constant 0 : index
    %115 = vector.load %arg5[%114, %c0_28] : memref<8x128xi32, #tpu.memory_space<vmem>>, vector<1x128xi32>
    %116 = arith.index_cast %c1_i32 : i32 to index
    %c0_29 = arith.constant 0 : index
    %117 = vector.load %arg6[%116, %c0_29] : memref<8x128xi32, #tpu.memory_space<vmem>>, vector<1x128xi32>
    %118 = arith.index_cast %c1_i32 : i32 to index
    %c0_30 = arith.constant 0 : index
    %119 = vector.load %arg7[%118, %c0_30] : memref<8x128xf32, #tpu.memory_space<vmem>>, vector<1x128xf32>
    %120 = arith.maximumf %94, %98 : vector<1x128xf32>
    %121 = arith.maximumf %102, %107 : vector<1x128xf32>
    %cst_31 = arith.constant 0.699999988 : f32
    %122 = vector.broadcast %cst_31 : f32 to vector<1x128xf32>
    %123 = arith.mulf %122, %120 : vector<1x128xf32>
    %cst_32 = arith.constant 3.000000e-01 : f32
    %124 = vector.broadcast %cst_32 : f32 to vector<1x128xf32>
    %125 = arith.mulf %124, %121 : vector<1x128xf32>
    %126 = arith.addf %123, %125 : vector<1x128xf32>
    %cst_33 = arith.constant 3.000000e-01 : f32
    %127 = vector.broadcast %cst_33 : f32 to vector<1x128xf32>
    %128 = arith.mulf %127, %120 : vector<1x128xf32>
    %cst_34 = arith.constant 0.699999988 : f32
    %129 = vector.broadcast %cst_34 : f32 to vector<1x128xf32>
    %130 = arith.mulf %129, %121 : vector<1x128xf32>
    %131 = arith.addf %128, %130 : vector<1x128xf32>
    %132 = arith.mulf %5, %126 : vector<1x128xf32>
    %133 = arith.mulf %7, %88 : vector<1x128xf32>
    %134 = arith.addf %132, %133 : vector<1x128xf32>
    %135 = arith.mulf %5, %131 : vector<1x128xf32>
    %136 = arith.mulf %7, %91 : vector<1x128xf32>
    %137 = arith.addf %135, %136 : vector<1x128xf32>
    %c-100_i32_35 = arith.constant -100 : i32
    %138 = vector.broadcast %c-100_i32_35 : i32 to vector<1x128xi32>
    %139 = arith.cmpi ne, %113, %138 : vector<1x128xi32>
    %c-100_i32_36 = arith.constant -100 : i32
    %140 = vector.broadcast %c-100_i32_36 : i32 to vector<1x128xi32>
    %141 = arith.cmpi ne, %115, %140 : vector<1x128xi32>
    %142 = arith.andi %139, %141 : vector<1x128xi1>
    %c0_i32_37 = arith.constant 0 : i32
    %143 = vector.broadcast %c0_i32_37 : i32 to vector<1x128xi32>
    %144 = arith.cmpi eq, %117, %143 : vector<1x128xi32>
    %c0_i32_38 = arith.constant 0 : i32
    %145 = vector.broadcast %c0_i32_38 : i32 to vector<1x128xi32>
    %146 = arith.cmpi eq, %113, %145 : vector<1x128xi32>
    %c0_i32_39 = arith.constant 0 : i32
    %147 = vector.broadcast %c0_i32_39 : i32 to vector<1x128xi32>
    %148 = arith.cmpi eq, %115, %147 : vector<1x128xi32>
    %149 = arith.select %144, %94, %102 : vector<1x128xi1>, vector<1x128xf32>
    %150 = arith.select %144, %98, %107 : vector<1x128xi1>, vector<1x128xf32>
    %151 = arith.mulf %134, %11 : vector<1x128xf32>
    %152 = arith.mulf %109, %13 : vector<1x128xf32>
    %153 = arith.addf %151, %152 : vector<1x128xf32>
    %154 = arith.select %139, %153, %14 : vector<1x128xi1>, vector<1x128xf32>
    %155 = arith.mulf %137, %11 : vector<1x128xf32>
    %156 = arith.mulf %111, %13 : vector<1x128xf32>
    %157 = arith.addf %155, %156 : vector<1x128xf32>
    %158 = arith.select %139, %157, %14 : vector<1x128xi1>, vector<1x128xf32>
    %159 = arith.mulf %149, %11 : vector<1x128xf32>
    %160 = arith.select %139, %159, %14 : vector<1x128xi1>, vector<1x128xf32>
    %161 = arith.mulf %150, %11 : vector<1x128xf32>
    %162 = arith.select %139, %161, %14 : vector<1x128xi1>, vector<1x128xf32>
    %163 = arith.index_cast %c1_i32 : i32 to index
    %c0_40 = arith.constant 0 : index
    %164 = vector.load %arg8[%163, %c0_40] : memref<8x128xf32, #tpu.memory_space<vmem>>, vector<1x128xf32>
    tpu.vector_store %arg8[%163, %c0_40], %154 {strides = array<i32>} : memref<8x128xf32, #tpu.memory_space<vmem>>, vector<1x128xf32>,
    %165 = arith.index_cast %c1_i32 : i32 to index
    %c0_41 = arith.constant 0 : index
    %166 = vector.load %arg9[%165, %c0_41] : memref<8x128xf32, #tpu.memory_space<vmem>>, vector<1x128xf32>
    tpu.vector_store %arg9[%165, %c0_41], %158 {strides = array<i32>} : memref<8x128xf32, #tpu.memory_space<vmem>>, vector<1x128xf32>,
    %167 = arith.index_cast %c1_i32 : i32 to index
    %c0_42 = arith.constant 0 : index
    %168 = vector.load %arg10[%167, %c0_42] : memref<8x128xf32, #tpu.memory_space<vmem>>, vector<1x128xf32>
    tpu.vector_store %arg10[%167, %c0_42], %160 {strides = array<i32>} : memref<8x128xf32, #tpu.memory_space<vmem>>, vector<1x128xf32>,
    %169 = arith.index_cast %c1_i32 : i32 to index
    %c0_43 = arith.constant 0 : index
    %170 = vector.load %arg11[%169, %c0_43] : memref<8x128xf32, #tpu.memory_space<vmem>>, vector<1x128xf32>
    tpu.vector_store %arg11[%169, %c0_43], %162 {strides = array<i32>} : memref<8x128xf32, #tpu.memory_space<vmem>>, vector<1x128xf32>,
    %171 = arith.select %146, %88, %91 : vector<1x128xi1>, vector<1x128xf32>
    %172 = arith.select %148, %149, %150 : vector<1x128xi1>, vector<1x128xf32>
    %173 = arith.subf %172, %171 : vector<1x128xf32>
    %174 = arith.subf %119, %172 : vector<1x128xf32>
    %175 = arith.mulf %8, %173 : vector<1x128xf32>
    %176 = arith.addf %171, %175 : vector<1x128xf32>
    %177 = arith.mulf %10, %174 : vector<1x128xf32>
    %178 = arith.addf %176, %177 : vector<1x128xf32>
    %179 = arith.mulf %8, %174 : vector<1x128xf32>
    %180 = arith.addf %172, %179 : vector<1x128xf32>
    %181 = arith.andi %142, %146 : vector<1x128xi1>
    %182 = arith.select %181, %178, %88 : vector<1x128xi1>, vector<1x128xf32>
    %cst_44 = arith.constant dense<true> : vector<1x128xi1>
    %183 = arith.xori %146, %cst_44 : vector<1x128xi1>
    %184 = arith.andi %142, %183 : vector<1x128xi1>
    %185 = arith.select %184, %178, %91 : vector<1x128xi1>, vector<1x128xf32>
    %186 = arith.andi %142, %144 : vector<1x128xi1>
    %187 = arith.andi %186, %148 : vector<1x128xi1>
    %188 = arith.select %187, %180, %94 : vector<1x128xi1>, vector<1x128xf32>
    %189 = arith.andi %142, %144 : vector<1x128xi1>
    %cst_45 = arith.constant dense<true> : vector<1x128xi1>
    %190 = arith.xori %148, %cst_45 : vector<1x128xi1>
    %191 = arith.andi %189, %190 : vector<1x128xi1>
    %192 = arith.select %191, %180, %98 : vector<1x128xi1>, vector<1x128xf32>
    %cst_46 = arith.constant dense<true> : vector<1x128xi1>
    %193 = arith.xori %144, %cst_46 : vector<1x128xi1>
    %194 = arith.andi %142, %193 : vector<1x128xi1>
    %195 = arith.andi %194, %148 : vector<1x128xi1>
    %196 = arith.select %195, %180, %102 : vector<1x128xi1>, vector<1x128xf32>
    %cst_47 = arith.constant dense<true> : vector<1x128xi1>
    %197 = arith.xori %144, %cst_47 : vector<1x128xi1>
    %198 = arith.andi %142, %197 : vector<1x128xi1>
    %cst_48 = arith.constant dense<true> : vector<1x128xi1>
    %199 = arith.xori %148, %cst_48 : vector<1x128xi1>
    %200 = arith.andi %198, %199 : vector<1x128xi1>
    %201 = arith.select %200, %180, %107 : vector<1x128xi1>, vector<1x128xf32>
    %202 = arith.select %146, %15, %14 : vector<1x128xi1>, vector<1x128xf32>
    %203 = arith.select %139, %202, %109 : vector<1x128xi1>, vector<1x128xf32>
    %204 = arith.select %146, %14, %15 : vector<1x128xi1>, vector<1x128xf32>
    %205 = arith.select %139, %204, %111 : vector<1x128xi1>, vector<1x128xf32>
    %c2_i32 = arith.constant 2 : i32
    %206 = arith.index_cast %c2_i32 : i32 to index
    %c0_49 = arith.constant 0 : index
    %207 = vector.load %arg4[%206, %c0_49] : memref<8x128xi32, #tpu.memory_space<vmem>>, vector<1x128xi32>
    %208 = arith.index_cast %c2_i32 : i32 to index
    %c0_50 = arith.constant 0 : index
    %209 = vector.load %arg5[%208, %c0_50] : memref<8x128xi32, #tpu.memory_space<vmem>>, vector<1x128xi32>
    %210 = arith.index_cast %c2_i32 : i32 to index
    %c0_51 = arith.constant 0 : index
    %211 = vector.load %arg6[%210, %c0_51] : memref<8x128xi32, #tpu.memory_space<vmem>>, vector<1x128xi32>
    %212 = arith.index_cast %c2_i32 : i32 to index
    %c0_52 = arith.constant 0 : index
    %213 = vector.load %arg7[%212, %c0_52] : memref<8x128xf32, #tpu.memory_space<vmem>>, vector<1x128xf32>
    %214 = arith.maximumf %188, %192 : vector<1x128xf32>
    %215 = arith.maximumf %196, %201 : vector<1x128xf32>
    %cst_53 = arith.constant 0.699999988 : f32
    %216 = vector.broadcast %cst_53 : f32 to vector<1x128xf32>
    %217 = arith.mulf %216, %214 : vector<1x128xf32>
    %cst_54 = arith.constant 3.000000e-01 : f32
    %218 = vector.broadcast %cst_54 : f32 to vector<1x128xf32>
    %219 = arith.mulf %218, %215 : vector<1x128xf32>
    %220 = arith.addf %217, %219 : vector<1x128xf32>
    %cst_55 = arith.constant 3.000000e-01 : f32
    %221 = vector.broadcast %cst_55 : f32 to vector<1x128xf32>
    %222 = arith.mulf %221, %214 : vector<1x128xf32>
    %cst_56 = arith.constant 0.699999988 : f32
    %223 = vector.broadcast %cst_56 : f32 to vector<1x128xf32>
    %224 = arith.mulf %223, %215 : vector<1x128xf32>
    %225 = arith.addf %222, %224 : vector<1x128xf32>
    %226 = arith.mulf %5, %220 : vector<1x128xf32>
    %227 = arith.mulf %7, %182 : vector<1x128xf32>
    %228 = arith.addf %226, %227 : vector<1x128xf32>
    %229 = arith.mulf %5, %225 : vector<1x128xf32>
    %230 = arith.mulf %7, %185 : vector<1x128xf32>
    %231 = arith.addf %229, %230 : vector<1x128xf32>
    %c-100_i32_57 = arith.constant -100 : i32
    %232 = vector.broadcast %c-100_i32_57 : i32 to vector<1x128xi32>
    %233 = arith.cmpi ne, %207, %232 : vector<1x128xi32>
    %c-100_i32_58 = arith.constant -100 : i32
    %234 = vector.broadcast %c-100_i32_58 : i32 to vector<1x128xi32>
    %235 = arith.cmpi ne, %209, %234 : vector<1x128xi32>
    %236 = arith.andi %233, %235 : vector<1x128xi1>
    %c0_i32_59 = arith.constant 0 : i32
    %237 = vector.broadcast %c0_i32_59 : i32 to vector<1x128xi32>
    %238 = arith.cmpi eq, %211, %237 : vector<1x128xi32>
    %c0_i32_60 = arith.constant 0 : i32
    %239 = vector.broadcast %c0_i32_60 : i32 to vector<1x128xi32>
    %240 = arith.cmpi eq, %207, %239 : vector<1x128xi32>
    %c0_i32_61 = arith.constant 0 : i32
    %241 = vector.broadcast %c0_i32_61 : i32 to vector<1x128xi32>
    %242 = arith.cmpi eq, %209, %241 : vector<1x128xi32>
    %243 = arith.select %238, %188, %196 : vector<1x128xi1>, vector<1x128xf32>
    %244 = arith.select %238, %192, %201 : vector<1x128xi1>, vector<1x128xf32>
    %245 = arith.mulf %228, %11 : vector<1x128xf32>
    %246 = arith.mulf %203, %13 : vector<1x128xf32>
    %247 = arith.addf %245, %246 : vector<1x128xf32>
    %248 = arith.select %233, %247, %14 : vector<1x128xi1>, vector<1x128xf32>
    %249 = arith.mulf %231, %11 : vector<1x128xf32>
    %250 = arith.mulf %205, %13 : vector<1x128xf32>
    %251 = arith.addf %249, %250 : vector<1x128xf32>
    %252 = arith.select %233, %251, %14 : vector<1x128xi1>, vector<1x128xf32>
    %253 = arith.mulf %243, %11 : vector<1x128xf32>
    %254 = arith.select %233, %253, %14 : vector<1x128xi1>, vector<1x128xf32>
    %255 = arith.mulf %244, %11 : vector<1x128xf32>
    %256 = arith.select %233, %255, %14 : vector<1x128xi1>, vector<1x128xf32>
    %257 = arith.index_cast %c2_i32 : i32 to index
    %c0_62 = arith.constant 0 : index
    %258 = vector.load %arg8[%257, %c0_62] : memref<8x128xf32, #tpu.memory_space<vmem>>, vector<1x128xf32>
    tpu.vector_store %arg8[%257, %c0_62], %248 {strides = array<i32>} : memref<8x128xf32, #tpu.memory_space<vmem>>, vector<1x128xf32>,
    %259 = arith.index_cast %c2_i32 : i32 to index
    %c0_63 = arith.constant 0 : index
    %260 = vector.load %arg9[%259, %c0_63] : memref<8x128xf32, #tpu.memory_space<vmem>>, vector<1x128xf32>
    tpu.vector_store %arg9[%259, %c0_63], %252 {strides = array<i32>} : memref<8x128xf32, #tpu.memory_space<vmem>>, vector<1x128xf32>,
    %261 = arith.index_cast %c2_i32 : i32 to index
    %c0_64 = arith.constant 0 : index
    %262 = vector.load %arg10[%261, %c0_64] : memref<8x128xf32, #tpu.memory_space<vmem>>, vector<1x128xf32>
    tpu.vector_store %arg10[%261, %c0_64], %254 {strides = array<i32>} : memref<8x128xf32, #tpu.memory_space<vmem>>, vector<1x128xf32>,
    %263 = arith.index_cast %c2_i32 : i32 to index
    %c0_65 = arith.constant 0 : index
    %264 = vector.load %arg11[%263, %c0_65] : memref<8x128xf32, #tpu.memory_space<vmem>>, vector<1x128xf32>
    tpu.vector_store %arg11[%263, %c0_65], %256 {strides = array<i32>} : memref<8x128xf32, #tpu.memory_space<vmem>>, vector<1x128xf32>,
    %265 = arith.select %240, %182, %185 : vector<1x128xi1>, vector<1x128xf32>
    %266 = arith.select %242, %243, %244 : vector<1x128xi1>, vector<1x128xf32>
    %267 = arith.subf %266, %265 : vector<1x128xf32>
    %268 = arith.subf %213, %266 : vector<1x128xf32>
    %269 = arith.mulf %8, %267 : vector<1x128xf32>
    %270 = arith.addf %265, %269 : vector<1x128xf32>
    %271 = arith.mulf %10, %268 : vector<1x128xf32>
    %272 = arith.addf %270, %271 : vector<1x128xf32>
    %273 = arith.mulf %8, %268 : vector<1x128xf32>
    %274 = arith.addf %266, %273 : vector<1x128xf32>
    %275 = arith.andi %236, %240 : vector<1x128xi1>
    %276 = arith.select %275, %272, %182 : vector<1x128xi1>, vector<1x128xf32>
    %cst_66 = arith.constant dense<true> : vector<1x128xi1>
    %277 = arith.xori %240, %cst_66 : vector<1x128xi1>
    %278 = arith.andi %236, %277 : vector<1x128xi1>
    %279 = arith.select %278, %272, %185 : vector<1x128xi1>, vector<1x128xf32>
    %280 = arith.andi %236, %238 : vector<1x128xi1>
    %281 = arith.andi %280, %242 : vector<1x128xi1>
    %282 = arith.select %281, %274, %188 : vector<1x128xi1>, vector<1x128xf32>
    %283 = arith.andi %236, %238 : vector<1x128xi1>
    %cst_67 = arith.constant dense<true> : vector<1x128xi1>
    %284 = arith.xori %242, %cst_67 : vector<1x128xi1>
    %285 = arith.andi %283, %284 : vector<1x128xi1>
    %286 = arith.select %285, %274, %192 : vector<1x128xi1>, vector<1x128xf32>
    %cst_68 = arith.constant dense<true> : vector<1x128xi1>
    %287 = arith.xori %238, %cst_68 : vector<1x128xi1>
    %288 = arith.andi %236, %287 : vector<1x128xi1>
    %289 = arith.andi %288, %242 : vector<1x128xi1>
    %290 = arith.select %289, %274, %196 : vector<1x128xi1>, vector<1x128xf32>
    %cst_69 = arith.constant dense<true> : vector<1x128xi1>
    %291 = arith.xori %238, %cst_69 : vector<1x128xi1>
    %292 = arith.andi %236, %291 : vector<1x128xi1>
    %cst_70 = arith.constant dense<true> : vector<1x128xi1>
    %293 = arith.xori %242, %cst_70 : vector<1x128xi1>
    %294 = arith.andi %292, %293 : vector<1x128xi1>
    %295 = arith.select %294, %274, %201 : vector<1x128xi1>, vector<1x128xf32>
    %296 = arith.select %240, %15, %14 : vector<1x128xi1>, vector<1x128xf32>
    %297 = arith.select %233, %296, %203 : vector<1x128xi1>, vector<1x128xf32>
    %298 = arith.select %240, %14, %15 : vector<1x128xi1>, vector<1x128xf32>
    %299 = arith.select %233, %298, %205 : vector<1x128xi1>, vector<1x128xf32>
    %c3_i32 = arith.constant 3 : i32
    %300 = arith.index_cast %c3_i32 : i32 to index
    %c0_71 = arith.constant 0 : index
    %301 = vector.load %arg4[%300, %c0_71] : memref<8x128xi32, #tpu.memory_space<vmem>>, vector<1x128xi32>
    %302 = arith.index_cast %c3_i32 : i32 to index
    %c0_72 = arith.constant 0 : index
    %303 = vector.load %arg5[%302, %c0_72] : memref<8x128xi32, #tpu.memory_space<vmem>>, vector<1x128xi32>
    %304 = arith.index_cast %c3_i32 : i32 to index
    %c0_73 = arith.constant 0 : index
    %305 = vector.load %arg6[%304, %c0_73] : memref<8x128xi32, #tpu.memory_space<vmem>>, vector<1x128xi32>
    %306 = arith.index_cast %c3_i32 : i32 to index
    %c0_74 = arith.constant 0 : index
    %307 = vector.load %arg7[%306, %c0_74] : memref<8x128xf32, #tpu.memory_space<vmem>>, vector<1x128xf32>
    %308 = arith.maximumf %282, %286 : vector<1x128xf32>
    %309 = arith.maximumf %290, %295 : vector<1x128xf32>
    %cst_75 = arith.constant 0.699999988 : f32
    %310 = vector.broadcast %cst_75 : f32 to vector<1x128xf32>
    %311 = arith.mulf %310, %308 : vector<1x128xf32>
    %cst_76 = arith.constant 3.000000e-01 : f32
    %312 = vector.broadcast %cst_76 : f32 to vector<1x128xf32>
    %313 = arith.mulf %312, %309 : vector<1x128xf32>
    %314 = arith.addf %311, %313 : vector<1x128xf32>
    %cst_77 = arith.constant 3.000000e-01 : f32
    %315 = vector.broadcast %cst_77 : f32 to vector<1x128xf32>
    %316 = arith.mulf %315, %308 : vector<1x128xf32>
    %cst_78 = arith.constant 0.699999988 : f32
    %317 = vector.broadcast %cst_78 : f32 to vector<1x128xf32>
    %318 = arith.mulf %317, %309 : vector<1x128xf32>
    %319 = arith.addf %316, %318 : vector<1x128xf32>
    %320 = arith.mulf %5, %314 : vector<1x128xf32>
    %321 = arith.mulf %7, %276 : vector<1x128xf32>
    %322 = arith.addf %320, %321 : vector<1x128xf32>
    %323 = arith.mulf %5, %319 : vector<1x128xf32>
    %324 = arith.mulf %7, %279 : vector<1x128xf32>
    %325 = arith.addf %323, %324 : vector<1x128xf32>
    %c-100_i32_79 = arith.constant -100 : i32
    %326 = vector.broadcast %c-100_i32_79 : i32 to vector<1x128xi32>
    %327 = arith.cmpi ne, %301, %326 : vector<1x128xi32>
    %c-100_i32_80 = arith.constant -100 : i32
    %328 = vector.broadcast %c-100_i32_80 : i32 to vector<1x128xi32>
    %329 = arith.cmpi ne, %303, %328 : vector<1x128xi32>
    %330 = arith.andi %327, %329 : vector<1x128xi1>
    %c0_i32_81 = arith.constant 0 : i32
    %331 = vector.broadcast %c0_i32_81 : i32 to vector<1x128xi32>
    %332 = arith.cmpi eq, %305, %331 : vector<1x128xi32>
    %c0_i32_82 = arith.constant 0 : i32
    %333 = vector.broadcast %c0_i32_82 : i32 to vector<1x128xi32>
    %334 = arith.cmpi eq, %301, %333 : vector<1x128xi32>
    %c0_i32_83 = arith.constant 0 : i32
    %335 = vector.broadcast %c0_i32_83 : i32 to vector<1x128xi32>
    %336 = arith.cmpi eq, %303, %335 : vector<1x128xi32>
    %337 = arith.select %332, %282, %290 : vector<1x128xi1>, vector<1x128xf32>
    %338 = arith.select %332, %286, %295 : vector<1x128xi1>, vector<1x128xf32>
    %339 = arith.mulf %322, %11 : vector<1x128xf32>
    %340 = arith.mulf %297, %13 : vector<1x128xf32>
    %341 = arith.addf %339, %340 : vector<1x128xf32>
    %342 = arith.select %327, %341, %14 : vector<1x128xi1>, vector<1x128xf32>
    %343 = arith.mulf %325, %11 : vector<1x128xf32>
    %344 = arith.mulf %299, %13 : vector<1x128xf32>
    %345 = arith.addf %343, %344 : vector<1x128xf32>
    %346 = arith.select %327, %345, %14 : vector<1x128xi1>, vector<1x128xf32>
    %347 = arith.mulf %337, %11 : vector<1x128xf32>
    %348 = arith.select %327, %347, %14 : vector<1x128xi1>, vector<1x128xf32>
    %349 = arith.mulf %338, %11 : vector<1x128xf32>
    %350 = arith.select %327, %349, %14 : vector<1x128xi1>, vector<1x128xf32>
    %351 = arith.index_cast %c3_i32 : i32 to index
    %c0_84 = arith.constant 0 : index
    %352 = vector.load %arg8[%351, %c0_84] : memref<8x128xf32, #tpu.memory_space<vmem>>, vector<1x128xf32>
    tpu.vector_store %arg8[%351, %c0_84], %342 {strides = array<i32>} : memref<8x128xf32, #tpu.memory_space<vmem>>, vector<1x128xf32>,
    %353 = arith.index_cast %c3_i32 : i32 to index
    %c0_85 = arith.constant 0 : index
    %354 = vector.load %arg9[%353, %c0_85] : memref<8x128xf32, #tpu.memory_space<vmem>>, vector<1x128xf32>
    tpu.vector_store %arg9[%353, %c0_85], %346 {strides = array<i32>} : memref<8x128xf32, #tpu.memory_space<vmem>>, vector<1x128xf32>,
    %355 = arith.index_cast %c3_i32 : i32 to index
    %c0_86 = arith.constant 0 : index
    %356 = vector.load %arg10[%355, %c0_86] : memref<8x128xf32, #tpu.memory_space<vmem>>, vector<1x128xf32>
    tpu.vector_store %arg10[%355, %c0_86], %348 {strides = array<i32>} : memref<8x128xf32, #tpu.memory_space<vmem>>, vector<1x128xf32>,
    %357 = arith.index_cast %c3_i32 : i32 to index
    %c0_87 = arith.constant 0 : index
    %358 = vector.load %arg11[%357, %c0_87] : memref<8x128xf32, #tpu.memory_space<vmem>>, vector<1x128xf32>
    tpu.vector_store %arg11[%357, %c0_87], %350 {strides = array<i32>} : memref<8x128xf32, #tpu.memory_space<vmem>>, vector<1x128xf32>,
    %359 = arith.select %334, %276, %279 : vector<1x128xi1>, vector<1x128xf32>
    %360 = arith.select %336, %337, %338 : vector<1x128xi1>, vector<1x128xf32>
    %361 = arith.subf %360, %359 : vector<1x128xf32>
    %362 = arith.subf %307, %360 : vector<1x128xf32>
    %363 = arith.mulf %8, %361 : vector<1x128xf32>
    %364 = arith.addf %359, %363 : vector<1x128xf32>
    %365 = arith.mulf %10, %362 : vector<1x128xf32>
    %366 = arith.addf %364, %365 : vector<1x128xf32>
    %367 = arith.mulf %8, %362 : vector<1x128xf32>
    %368 = arith.addf %360, %367 : vector<1x128xf32>
    %369 = arith.andi %330, %334 : vector<1x128xi1>
    %370 = arith.select %369, %366, %276 : vector<1x128xi1>, vector<1x128xf32>
    %cst_88 = arith.constant dense<true> : vector<1x128xi1>
    %371 = arith.xori %334, %cst_88 : vector<1x128xi1>
    %372 = arith.andi %330, %371 : vector<1x128xi1>
    %373 = arith.select %372, %366, %279 : vector<1x128xi1>, vector<1x128xf32>
    %374 = arith.andi %330, %332 : vector<1x128xi1>
    %375 = arith.andi %374, %336 : vector<1x128xi1>
    %376 = arith.select %375, %368, %282 : vector<1x128xi1>, vector<1x128xf32>
    %377 = arith.andi %330, %332 : vector<1x128xi1>
    %cst_89 = arith.constant dense<true> : vector<1x128xi1>
    %378 = arith.xori %336, %cst_89 : vector<1x128xi1>
    %379 = arith.andi %377, %378 : vector<1x128xi1>
    %380 = arith.select %379, %368, %286 : vector<1x128xi1>, vector<1x128xf32>
    %cst_90 = arith.constant dense<true> : vector<1x128xi1>
    %381 = arith.xori %332, %cst_90 : vector<1x128xi1>
    %382 = arith.andi %330, %381 : vector<1x128xi1>
    %383 = arith.andi %382, %336 : vector<1x128xi1>
    %384 = arith.select %383, %368, %290 : vector<1x128xi1>, vector<1x128xf32>
    %cst_91 = arith.constant dense<true> : vector<1x128xi1>
    %385 = arith.xori %332, %cst_91 : vector<1x128xi1>
    %386 = arith.andi %330, %385 : vector<1x128xi1>
    %cst_92 = arith.constant dense<true> : vector<1x128xi1>
    %387 = arith.xori %336, %cst_92 : vector<1x128xi1>
    %388 = arith.andi %386, %387 : vector<1x128xi1>
    %389 = arith.select %388, %368, %295 : vector<1x128xi1>, vector<1x128xf32>
    %390 = arith.select %334, %15, %14 : vector<1x128xi1>, vector<1x128xf32>
    %391 = arith.select %327, %390, %297 : vector<1x128xi1>, vector<1x128xf32>
    %392 = arith.select %334, %14, %15 : vector<1x128xi1>, vector<1x128xf32>
    %393 = arith.select %327, %392, %299 : vector<1x128xi1>, vector<1x128xf32>
    %c4_i32 = arith.constant 4 : i32
    %394 = arith.index_cast %c4_i32 : i32 to index
    %c0_93 = arith.constant 0 : index
    %395 = vector.load %arg4[%394, %c0_93] : memref<8x128xi32, #tpu.memory_space<vmem>>, vector<1x128xi32>
    %396 = arith.index_cast %c4_i32 : i32 to index
    %c0_94 = arith.constant 0 : index
    %397 = vector.load %arg5[%396, %c0_94] : memref<8x128xi32, #tpu.memory_space<vmem>>, vector<1x128xi32>
    %398 = arith.index_cast %c4_i32 : i32 to index
    %c0_95 = arith.constant 0 : index
    %399 = vector.load %arg6[%398, %c0_95] : memref<8x128xi32, #tpu.memory_space<vmem>>, vector<1x128xi32>
    %400 = arith.index_cast %c4_i32 : i32 to index
    %c0_96 = arith.constant 0 : index
    %401 = vector.load %arg7[%400, %c0_96] : memref<8x128xf32, #tpu.memory_space<vmem>>, vector<1x128xf32>
    %402 = arith.maximumf %376, %380 : vector<1x128xf32>
    %403 = arith.maximumf %384, %389 : vector<1x128xf32>
    %cst_97 = arith.constant 0.699999988 : f32
    %404 = vector.broadcast %cst_97 : f32 to vector<1x128xf32>
    %405 = arith.mulf %404, %402 : vector<1x128xf32>
    %cst_98 = arith.constant 3.000000e-01 : f32
    %406 = vector.broadcast %cst_98 : f32 to vector<1x128xf32>
    %407 = arith.mulf %406, %403 : vector<1x128xf32>
    %408 = arith.addf %405, %407 : vector<1x128xf32>
    %cst_99 = arith.constant 3.000000e-01 : f32
    %409 = vector.broadcast %cst_99 : f32 to vector<1x128xf32>
    %410 = arith.mulf %409, %402 : vector<1x128xf32>
    %cst_100 = arith.constant 0.699999988 : f32
    %411 = vector.broadcast %cst_100 : f32 to vector<1x128xf32>
    %412 = arith.mulf %411, %403 : vector<1x128xf32>
    %413 = arith.addf %410, %412 : vector<1x128xf32>
    %414 = arith.mulf %5, %408 : vector<1x128xf32>
    %415 = arith.mulf %7, %370 : vector<1x128xf32>
    %416 = arith.addf %414, %415 : vector<1x128xf32>
    %417 = arith.mulf %5, %413 : vector<1x128xf32>
    %418 = arith.mulf %7, %373 : vector<1x128xf32>
    %419 = arith.addf %417, %418 : vector<1x128xf32>
    %c-100_i32_101 = arith.constant -100 : i32
    %420 = vector.broadcast %c-100_i32_101 : i32 to vector<1x128xi32>
    %421 = arith.cmpi ne, %395, %420 : vector<1x128xi32>
    %c-100_i32_102 = arith.constant -100 : i32
    %422 = vector.broadcast %c-100_i32_102 : i32 to vector<1x128xi32>
    %423 = arith.cmpi ne, %397, %422 : vector<1x128xi32>
    %424 = arith.andi %421, %423 : vector<1x128xi1>
    %c0_i32_103 = arith.constant 0 : i32
    %425 = vector.broadcast %c0_i32_103 : i32 to vector<1x128xi32>
    %426 = arith.cmpi eq, %399, %425 : vector<1x128xi32>
    %c0_i32_104 = arith.constant 0 : i32
    %427 = vector.broadcast %c0_i32_104 : i32 to vector<1x128xi32>
    %428 = arith.cmpi eq, %395, %427 : vector<1x128xi32>
    %c0_i32_105 = arith.constant 0 : i32
    %429 = vector.broadcast %c0_i32_105 : i32 to vector<1x128xi32>
    %430 = arith.cmpi eq, %397, %429 : vector<1x128xi32>
    %431 = arith.select %426, %376, %384 : vector<1x128xi1>, vector<1x128xf32>
    %432 = arith.select %426, %380, %389 : vector<1x128xi1>, vector<1x128xf32>
    %433 = arith.mulf %416, %11 : vector<1x128xf32>
    %434 = arith.mulf %391, %13 : vector<1x128xf32>
    %435 = arith.addf %433, %434 : vector<1x128xf32>
    %436 = arith.select %421, %435, %14 : vector<1x128xi1>, vector<1x128xf32>
    %437 = arith.mulf %419, %11 : vector<1x128xf32>
    %438 = arith.mulf %393, %13 : vector<1x128xf32>
    %439 = arith.addf %437, %438 : vector<1x128xf32>
    %440 = arith.select %421, %439, %14 : vector<1x128xi1>, vector<1x128xf32>
    %441 = arith.mulf %431, %11 : vector<1x128xf32>
    %442 = arith.select %421, %441, %14 : vector<1x128xi1>, vector<1x128xf32>
    %443 = arith.mulf %432, %11 : vector<1x128xf32>
    %444 = arith.select %421, %443, %14 : vector<1x128xi1>, vector<1x128xf32>
    %445 = arith.index_cast %c4_i32 : i32 to index
    %c0_106 = arith.constant 0 : index
    %446 = vector.load %arg8[%445, %c0_106] : memref<8x128xf32, #tpu.memory_space<vmem>>, vector<1x128xf32>
    tpu.vector_store %arg8[%445, %c0_106], %436 {strides = array<i32>} : memref<8x128xf32, #tpu.memory_space<vmem>>, vector<1x128xf32>,
    %447 = arith.index_cast %c4_i32 : i32 to index
    %c0_107 = arith.constant 0 : index
    %448 = vector.load %arg9[%447, %c0_107] : memref<8x128xf32, #tpu.memory_space<vmem>>, vector<1x128xf32>
    tpu.vector_store %arg9[%447, %c0_107], %440 {strides = array<i32>} : memref<8x128xf32, #tpu.memory_space<vmem>>, vector<1x128xf32>,
    %449 = arith.index_cast %c4_i32 : i32 to index
    %c0_108 = arith.constant 0 : index
    %450 = vector.load %arg10[%449, %c0_108] : memref<8x128xf32, #tpu.memory_space<vmem>>, vector<1x128xf32>
    tpu.vector_store %arg10[%449, %c0_108], %442 {strides = array<i32>} : memref<8x128xf32, #tpu.memory_space<vmem>>, vector<1x128xf32>,
    %451 = arith.index_cast %c4_i32 : i32 to index
    %c0_109 = arith.constant 0 : index
    %452 = vector.load %arg11[%451, %c0_109] : memref<8x128xf32, #tpu.memory_space<vmem>>, vector<1x128xf32>
    tpu.vector_store %arg11[%451, %c0_109], %444 {strides = array<i32>} : memref<8x128xf32, #tpu.memory_space<vmem>>, vector<1x128xf32>,
    %453 = arith.select %428, %370, %373 : vector<1x128xi1>, vector<1x128xf32>
    %454 = arith.select %430, %431, %432 : vector<1x128xi1>, vector<1x128xf32>
    %455 = arith.subf %454, %453 : vector<1x128xf32>
    %456 = arith.subf %401, %454 : vector<1x128xf32>
    %457 = arith.mulf %8, %455 : vector<1x128xf32>
    %458 = arith.addf %453, %457 : vector<1x128xf32>
    %459 = arith.mulf %10, %456 : vector<1x128xf32>
    %460 = arith.addf %458, %459 : vector<1x128xf32>
    %461 = arith.mulf %8, %456 : vector<1x128xf32>
    %462 = arith.addf %454, %461 : vector<1x128xf32>
    %463 = arith.andi %424, %428 : vector<1x128xi1>
    %464 = arith.select %463, %460, %370 : vector<1x128xi1>, vector<1x128xf32>
    %cst_110 = arith.constant dense<true> : vector<1x128xi1>
    %465 = arith.xori %428, %cst_110 : vector<1x128xi1>
    %466 = arith.andi %424, %465 : vector<1x128xi1>
    %467 = arith.select %466, %460, %373 : vector<1x128xi1>, vector<1x128xf32>
    %468 = arith.andi %424, %426 : vector<1x128xi1>
    %469 = arith.andi %468, %430 : vector<1x128xi1>
    %470 = arith.select %469, %462, %376 : vector<1x128xi1>, vector<1x128xf32>
    %471 = arith.andi %424, %426 : vector<1x128xi1>
    %cst_111 = arith.constant dense<true> : vector<1x128xi1>
    %472 = arith.xori %430, %cst_111 : vector<1x128xi1>
    %473 = arith.andi %471, %472 : vector<1x128xi1>
    %474 = arith.select %473, %462, %380 : vector<1x128xi1>, vector<1x128xf32>
    %cst_112 = arith.constant dense<true> : vector<1x128xi1>
    %475 = arith.xori %426, %cst_112 : vector<1x128xi1>
    %476 = arith.andi %424, %475 : vector<1x128xi1>
    %477 = arith.andi %476, %430 : vector<1x128xi1>
    %478 = arith.select %477, %462, %384 : vector<1x128xi1>, vector<1x128xf32>
    %cst_113 = arith.constant dense<true> : vector<1x128xi1>
    %479 = arith.xori %426, %cst_113 : vector<1x128xi1>
    %480 = arith.andi %424, %479 : vector<1x128xi1>
    %cst_114 = arith.constant dense<true> : vector<1x128xi1>
    %481 = arith.xori %430, %cst_114 : vector<1x128xi1>
    %482 = arith.andi %480, %481 : vector<1x128xi1>
    %483 = arith.select %482, %462, %389 : vector<1x128xi1>, vector<1x128xf32>
    %484 = arith.select %428, %15, %14 : vector<1x128xi1>, vector<1x128xf32>
    %485 = arith.select %421, %484, %391 : vector<1x128xi1>, vector<1x128xf32>
    %486 = arith.select %428, %14, %15 : vector<1x128xi1>, vector<1x128xf32>
    %487 = arith.select %421, %486, %393 : vector<1x128xi1>, vector<1x128xf32>
    %c5_i32 = arith.constant 5 : i32
    %488 = arith.index_cast %c5_i32 : i32 to index
    %c0_115 = arith.constant 0 : index
    %489 = vector.load %arg4[%488, %c0_115] : memref<8x128xi32, #tpu.memory_space<vmem>>, vector<1x128xi32>
    %490 = arith.index_cast %c5_i32 : i32 to index
    %c0_116 = arith.constant 0 : index
    %491 = vector.load %arg5[%490, %c0_116] : memref<8x128xi32, #tpu.memory_space<vmem>>, vector<1x128xi32>
    %492 = arith.index_cast %c5_i32 : i32 to index
    %c0_117 = arith.constant 0 : index
    %493 = vector.load %arg6[%492, %c0_117] : memref<8x128xi32, #tpu.memory_space<vmem>>, vector<1x128xi32>
    %494 = arith.index_cast %c5_i32 : i32 to index
    %c0_118 = arith.constant 0 : index
    %495 = vector.load %arg7[%494, %c0_118] : memref<8x128xf32, #tpu.memory_space<vmem>>, vector<1x128xf32>
    %496 = arith.maximumf %470, %474 : vector<1x128xf32>
    %497 = arith.maximumf %478, %483 : vector<1x128xf32>
    %cst_119 = arith.constant 0.699999988 : f32
    %498 = vector.broadcast %cst_119 : f32 to vector<1x128xf32>
    %499 = arith.mulf %498, %496 : vector<1x128xf32>
    %cst_120 = arith.constant 3.000000e-01 : f32
    %500 = vector.broadcast %cst_120 : f32 to vector<1x128xf32>
    %501 = arith.mulf %500, %497 : vector<1x128xf32>
    %502 = arith.addf %499, %501 : vector<1x128xf32>
    %cst_121 = arith.constant 3.000000e-01 : f32
    %503 = vector.broadcast %cst_121 : f32 to vector<1x128xf32>
    %504 = arith.mulf %503, %496 : vector<1x128xf32>
    %cst_122 = arith.constant 0.699999988 : f32
    %505 = vector.broadcast %cst_122 : f32 to vector<1x128xf32>
    %506 = arith.mulf %505, %497 : vector<1x128xf32>
    %507 = arith.addf %504, %506 : vector<1x128xf32>
    %508 = arith.mulf %5, %502 : vector<1x128xf32>
    %509 = arith.mulf %7, %464 : vector<1x128xf32>
    %510 = arith.addf %508, %509 : vector<1x128xf32>
    %511 = arith.mulf %5, %507 : vector<1x128xf32>
    %512 = arith.mulf %7, %467 : vector<1x128xf32>
    %513 = arith.addf %511, %512 : vector<1x128xf32>
    %c-100_i32_123 = arith.constant -100 : i32
    %514 = vector.broadcast %c-100_i32_123 : i32 to vector<1x128xi32>
    %515 = arith.cmpi ne, %489, %514 : vector<1x128xi32>
    %c-100_i32_124 = arith.constant -100 : i32
    %516 = vector.broadcast %c-100_i32_124 : i32 to vector<1x128xi32>
    %517 = arith.cmpi ne, %491, %516 : vector<1x128xi32>
    %518 = arith.andi %515, %517 : vector<1x128xi1>
    %c0_i32_125 = arith.constant 0 : i32
    %519 = vector.broadcast %c0_i32_125 : i32 to vector<1x128xi32>
    %520 = arith.cmpi eq, %493, %519 : vector<1x128xi32>
    %c0_i32_126 = arith.constant 0 : i32
    %521 = vector.broadcast %c0_i32_126 : i32 to vector<1x128xi32>
    %522 = arith.cmpi eq, %489, %521 : vector<1x128xi32>
    %c0_i32_127 = arith.constant 0 : i32
    %523 = vector.broadcast %c0_i32_127 : i32 to vector<1x128xi32>
    %524 = arith.cmpi eq, %491, %523 : vector<1x128xi32>
    %525 = arith.select %520, %470, %478 : vector<1x128xi1>, vector<1x128xf32>
    %526 = arith.select %520, %474, %483 : vector<1x128xi1>, vector<1x128xf32>
    %527 = arith.mulf %510, %11 : vector<1x128xf32>
    %528 = arith.mulf %485, %13 : vector<1x128xf32>
    %529 = arith.addf %527, %528 : vector<1x128xf32>
    %530 = arith.select %515, %529, %14 : vector<1x128xi1>, vector<1x128xf32>
    %531 = arith.mulf %513, %11 : vector<1x128xf32>
    %532 = arith.mulf %487, %13 : vector<1x128xf32>
    %533 = arith.addf %531, %532 : vector<1x128xf32>
    %534 = arith.select %515, %533, %14 : vector<1x128xi1>, vector<1x128xf32>
    %535 = arith.mulf %525, %11 : vector<1x128xf32>
    %536 = arith.select %515, %535, %14 : vector<1x128xi1>, vector<1x128xf32>
    %537 = arith.mulf %526, %11 : vector<1x128xf32>
    %538 = arith.select %515, %537, %14 : vector<1x128xi1>, vector<1x128xf32>
    %539 = arith.index_cast %c5_i32 : i32 to index
    %c0_128 = arith.constant 0 : index
    %540 = vector.load %arg8[%539, %c0_128] : memref<8x128xf32, #tpu.memory_space<vmem>>, vector<1x128xf32>
    tpu.vector_store %arg8[%539, %c0_128], %530 {strides = array<i32>} : memref<8x128xf32, #tpu.memory_space<vmem>>, vector<1x128xf32>,
    %541 = arith.index_cast %c5_i32 : i32 to index
    %c0_129 = arith.constant 0 : index
    %542 = vector.load %arg9[%541, %c0_129] : memref<8x128xf32, #tpu.memory_space<vmem>>, vector<1x128xf32>
    tpu.vector_store %arg9[%541, %c0_129], %534 {strides = array<i32>} : memref<8x128xf32, #tpu.memory_space<vmem>>, vector<1x128xf32>,
    %543 = arith.index_cast %c5_i32 : i32 to index
    %c0_130 = arith.constant 0 : index
    %544 = vector.load %arg10[%543, %c0_130] : memref<8x128xf32, #tpu.memory_space<vmem>>, vector<1x128xf32>
    tpu.vector_store %arg10[%543, %c0_130], %536 {strides = array<i32>} : memref<8x128xf32, #tpu.memory_space<vmem>>, vector<1x128xf32>,
    %545 = arith.index_cast %c5_i32 : i32 to index
    %c0_131 = arith.constant 0 : index
    %546 = vector.load %arg11[%545, %c0_131] : memref<8x128xf32, #tpu.memory_space<vmem>>, vector<1x128xf32>
    tpu.vector_store %arg11[%545, %c0_131], %538 {strides = array<i32>} : memref<8x128xf32, #tpu.memory_space<vmem>>, vector<1x128xf32>,
    %547 = arith.select %522, %464, %467 : vector<1x128xi1>, vector<1x128xf32>
    %548 = arith.select %524, %525, %526 : vector<1x128xi1>, vector<1x128xf32>
    %549 = arith.subf %548, %547 : vector<1x128xf32>
    %550 = arith.subf %495, %548 : vector<1x128xf32>
    %551 = arith.mulf %8, %549 : vector<1x128xf32>
    %552 = arith.addf %547, %551 : vector<1x128xf32>
    %553 = arith.mulf %10, %550 : vector<1x128xf32>
    %554 = arith.addf %552, %553 : vector<1x128xf32>
    %555 = arith.mulf %8, %550 : vector<1x128xf32>
    %556 = arith.addf %548, %555 : vector<1x128xf32>
    %557 = arith.andi %518, %522 : vector<1x128xi1>
    %558 = arith.select %557, %554, %464 : vector<1x128xi1>, vector<1x128xf32>
    %cst_132 = arith.constant dense<true> : vector<1x128xi1>
    %559 = arith.xori %522, %cst_132 : vector<1x128xi1>
    %560 = arith.andi %518, %559 : vector<1x128xi1>
    %561 = arith.select %560, %554, %467 : vector<1x128xi1>, vector<1x128xf32>
    %562 = arith.andi %518, %520 : vector<1x128xi1>
    %563 = arith.andi %562, %524 : vector<1x128xi1>
    %564 = arith.select %563, %556, %470 : vector<1x128xi1>, vector<1x128xf32>
    %565 = arith.andi %518, %520 : vector<1x128xi1>
    %cst_133 = arith.constant dense<true> : vector<1x128xi1>
    %566 = arith.xori %524, %cst_133 : vector<1x128xi1>
    %567 = arith.andi %565, %566 : vector<1x128xi1>
    %568 = arith.select %567, %556, %474 : vector<1x128xi1>, vector<1x128xf32>
    %cst_134 = arith.constant dense<true> : vector<1x128xi1>
    %569 = arith.xori %520, %cst_134 : vector<1x128xi1>
    %570 = arith.andi %518, %569 : vector<1x128xi1>
    %571 = arith.andi %570, %524 : vector<1x128xi1>
    %572 = arith.select %571, %556, %478 : vector<1x128xi1>, vector<1x128xf32>
    %cst_135 = arith.constant dense<true> : vector<1x128xi1>
    %573 = arith.xori %520, %cst_135 : vector<1x128xi1>
    %574 = arith.andi %518, %573 : vector<1x128xi1>
    %cst_136 = arith.constant dense<true> : vector<1x128xi1>
    %575 = arith.xori %524, %cst_136 : vector<1x128xi1>
    %576 = arith.andi %574, %575 : vector<1x128xi1>
    %577 = arith.select %576, %556, %483 : vector<1x128xi1>, vector<1x128xf32>
    %578 = arith.select %522, %15, %14 : vector<1x128xi1>, vector<1x128xf32>
    %579 = arith.select %515, %578, %485 : vector<1x128xi1>, vector<1x128xf32>
    %580 = arith.select %522, %14, %15 : vector<1x128xi1>, vector<1x128xf32>
    %581 = arith.select %515, %580, %487 : vector<1x128xi1>, vector<1x128xf32>
    %c6_i32 = arith.constant 6 : i32
    %582 = arith.index_cast %c6_i32 : i32 to index
    %c0_137 = arith.constant 0 : index
    %583 = vector.load %arg4[%582, %c0_137] : memref<8x128xi32, #tpu.memory_space<vmem>>, vector<1x128xi32>
    %584 = arith.index_cast %c6_i32 : i32 to index
    %c0_138 = arith.constant 0 : index
    %585 = vector.load %arg5[%584, %c0_138] : memref<8x128xi32, #tpu.memory_space<vmem>>, vector<1x128xi32>
    %586 = arith.index_cast %c6_i32 : i32 to index
    %c0_139 = arith.constant 0 : index
    %587 = vector.load %arg6[%586, %c0_139] : memref<8x128xi32, #tpu.memory_space<vmem>>, vector<1x128xi32>
    %588 = arith.index_cast %c6_i32 : i32 to index
    %c0_140 = arith.constant 0 : index
    %589 = vector.load %arg7[%588, %c0_140] : memref<8x128xf32, #tpu.memory_space<vmem>>, vector<1x128xf32>
    %590 = arith.maximumf %564, %568 : vector<1x128xf32>
    %591 = arith.maximumf %572, %577 : vector<1x128xf32>
    %cst_141 = arith.constant 0.699999988 : f32
    %592 = vector.broadcast %cst_141 : f32 to vector<1x128xf32>
    %593 = arith.mulf %592, %590 : vector<1x128xf32>
    %cst_142 = arith.constant 3.000000e-01 : f32
    %594 = vector.broadcast %cst_142 : f32 to vector<1x128xf32>
    %595 = arith.mulf %594, %591 : vector<1x128xf32>
    %596 = arith.addf %593, %595 : vector<1x128xf32>
    %cst_143 = arith.constant 3.000000e-01 : f32
    %597 = vector.broadcast %cst_143 : f32 to vector<1x128xf32>
    %598 = arith.mulf %597, %590 : vector<1x128xf32>
    %cst_144 = arith.constant 0.699999988 : f32
    %599 = vector.broadcast %cst_144 : f32 to vector<1x128xf32>
    %600 = arith.mulf %599, %591 : vector<1x128xf32>
    %601 = arith.addf %598, %600 : vector<1x128xf32>
    %602 = arith.mulf %5, %596 : vector<1x128xf32>
    %603 = arith.mulf %7, %558 : vector<1x128xf32>
    %604 = arith.addf %602, %603 : vector<1x128xf32>
    %605 = arith.mulf %5, %601 : vector<1x128xf32>
    %606 = arith.mulf %7, %561 : vector<1x128xf32>
    %607 = arith.addf %605, %606 : vector<1x128xf32>
    %c-100_i32_145 = arith.constant -100 : i32
    %608 = vector.broadcast %c-100_i32_145 : i32 to vector<1x128xi32>
    %609 = arith.cmpi ne, %583, %608 : vector<1x128xi32>
    %c-100_i32_146 = arith.constant -100 : i32
    %610 = vector.broadcast %c-100_i32_146 : i32 to vector<1x128xi32>
    %611 = arith.cmpi ne, %585, %610 : vector<1x128xi32>
    %612 = arith.andi %609, %611 : vector<1x128xi1>
    %c0_i32_147 = arith.constant 0 : i32
    %613 = vector.broadcast %c0_i32_147 : i32 to vector<1x128xi32>
    %614 = arith.cmpi eq, %587, %613 : vector<1x128xi32>
    %c0_i32_148 = arith.constant 0 : i32
    %615 = vector.broadcast %c0_i32_148 : i32 to vector<1x128xi32>
    %616 = arith.cmpi eq, %583, %615 : vector<1x128xi32>
    %c0_i32_149 = arith.constant 0 : i32
    %617 = vector.broadcast %c0_i32_149 : i32 to vector<1x128xi32>
    %618 = arith.cmpi eq, %585, %617 : vector<1x128xi32>
    %619 = arith.select %614, %564, %572 : vector<1x128xi1>, vector<1x128xf32>
    %620 = arith.select %614, %568, %577 : vector<1x128xi1>, vector<1x128xf32>
    %621 = arith.mulf %604, %11 : vector<1x128xf32>
    %622 = arith.mulf %579, %13 : vector<1x128xf32>
    %623 = arith.addf %621, %622 : vector<1x128xf32>
    %624 = arith.select %609, %623, %14 : vector<1x128xi1>, vector<1x128xf32>
    %625 = arith.mulf %607, %11 : vector<1x128xf32>
    %626 = arith.mulf %581, %13 : vector<1x128xf32>
    %627 = arith.addf %625, %626 : vector<1x128xf32>
    %628 = arith.select %609, %627, %14 : vector<1x128xi1>, vector<1x128xf32>
    %629 = arith.mulf %619, %11 : vector<1x128xf32>
    %630 = arith.select %609, %629, %14 : vector<1x128xi1>, vector<1x128xf32>
    %631 = arith.mulf %620, %11 : vector<1x128xf32>
    %632 = arith.select %609, %631, %14 : vector<1x128xi1>, vector<1x128xf32>
    %633 = arith.index_cast %c6_i32 : i32 to index
    %c0_150 = arith.constant 0 : index
    %634 = vector.load %arg8[%633, %c0_150] : memref<8x128xf32, #tpu.memory_space<vmem>>, vector<1x128xf32>
    tpu.vector_store %arg8[%633, %c0_150], %624 {strides = array<i32>} : memref<8x128xf32, #tpu.memory_space<vmem>>, vector<1x128xf32>,
    %635 = arith.index_cast %c6_i32 : i32 to index
    %c0_151 = arith.constant 0 : index
    %636 = vector.load %arg9[%635, %c0_151] : memref<8x128xf32, #tpu.memory_space<vmem>>, vector<1x128xf32>
    tpu.vector_store %arg9[%635, %c0_151], %628 {strides = array<i32>} : memref<8x128xf32, #tpu.memory_space<vmem>>, vector<1x128xf32>,
    %637 = arith.index_cast %c6_i32 : i32 to index
    %c0_152 = arith.constant 0 : index
    %638 = vector.load %arg10[%637, %c0_152] : memref<8x128xf32, #tpu.memory_space<vmem>>, vector<1x128xf32>
    tpu.vector_store %arg10[%637, %c0_152], %630 {strides = array<i32>} : memref<8x128xf32, #tpu.memory_space<vmem>>, vector<1x128xf32>,
    %639 = arith.index_cast %c6_i32 : i32 to index
    %c0_153 = arith.constant 0 : index
    %640 = vector.load %arg11[%639, %c0_153] : memref<8x128xf32, #tpu.memory_space<vmem>>, vector<1x128xf32>
    tpu.vector_store %arg11[%639, %c0_153], %632 {strides = array<i32>} : memref<8x128xf32, #tpu.memory_space<vmem>>, vector<1x128xf32>,
    %641 = arith.select %616, %558, %561 : vector<1x128xi1>, vector<1x128xf32>
    %642 = arith.select %618, %619, %620 : vector<1x128xi1>, vector<1x128xf32>
    %643 = arith.subf %642, %641 : vector<1x128xf32>
    %644 = arith.subf %589, %642 : vector<1x128xf32>
    %645 = arith.mulf %8, %643 : vector<1x128xf32>
    %646 = arith.addf %641, %645 : vector<1x128xf32>
    %647 = arith.mulf %10, %644 : vector<1x128xf32>
    %648 = arith.addf %646, %647 : vector<1x128xf32>
    %649 = arith.mulf %8, %644 : vector<1x128xf32>
    %650 = arith.addf %642, %649 : vector<1x128xf32>
    %651 = arith.andi %612, %616 : vector<1x128xi1>
    %652 = arith.select %651, %648, %558 : vector<1x128xi1>, vector<1x128xf32>
    %cst_154 = arith.constant dense<true> : vector<1x128xi1>
    %653 = arith.xori %616, %cst_154 : vector<1x128xi1>
    %654 = arith.andi %612, %653 : vector<1x128xi1>
    %655 = arith.select %654, %648, %561 : vector<1x128xi1>, vector<1x128xf32>
    %656 = arith.andi %612, %614 : vector<1x128xi1>
    %657 = arith.andi %656, %618 : vector<1x128xi1>
    %658 = arith.select %657, %650, %564 : vector<1x128xi1>, vector<1x128xf32>
    %659 = arith.andi %612, %614 : vector<1x128xi1>
    %cst_155 = arith.constant dense<true> : vector<1x128xi1>
    %660 = arith.xori %618, %cst_155 : vector<1x128xi1>
    %661 = arith.andi %659, %660 : vector<1x128xi1>
    %662 = arith.select %661, %650, %568 : vector<1x128xi1>, vector<1x128xf32>
    %cst_156 = arith.constant dense<true> : vector<1x128xi1>
    %663 = arith.xori %614, %cst_156 : vector<1x128xi1>
    %664 = arith.andi %612, %663 : vector<1x128xi1>
    %665 = arith.andi %664, %618 : vector<1x128xi1>
    %666 = arith.select %665, %650, %572 : vector<1x128xi1>, vector<1x128xf32>
    %cst_157 = arith.constant dense<true> : vector<1x128xi1>
    %667 = arith.xori %614, %cst_157 : vector<1x128xi1>
    %668 = arith.andi %612, %667 : vector<1x128xi1>
    %cst_158 = arith.constant dense<true> : vector<1x128xi1>
    %669 = arith.xori %618, %cst_158 : vector<1x128xi1>
    %670 = arith.andi %668, %669 : vector<1x128xi1>
    %671 = arith.select %670, %650, %577 : vector<1x128xi1>, vector<1x128xf32>
    %672 = arith.select %616, %15, %14 : vector<1x128xi1>, vector<1x128xf32>
    %673 = arith.select %609, %672, %579 : vector<1x128xi1>, vector<1x128xf32>
    %674 = arith.select %616, %14, %15 : vector<1x128xi1>, vector<1x128xf32>
    %675 = arith.select %609, %674, %581 : vector<1x128xi1>, vector<1x128xf32>
    %c7_i32 = arith.constant 7 : i32
    %676 = arith.index_cast %c7_i32 : i32 to index
    %c0_159 = arith.constant 0 : index
    %677 = vector.load %arg4[%676, %c0_159] : memref<8x128xi32, #tpu.memory_space<vmem>>, vector<1x128xi32>
    %678 = arith.index_cast %c7_i32 : i32 to index
    %c0_160 = arith.constant 0 : index
    %679 = vector.load %arg5[%678, %c0_160] : memref<8x128xi32, #tpu.memory_space<vmem>>, vector<1x128xi32>
    %680 = arith.index_cast %c7_i32 : i32 to index
    %c0_161 = arith.constant 0 : index
    %681 = vector.load %arg6[%680, %c0_161] : memref<8x128xi32, #tpu.memory_space<vmem>>, vector<1x128xi32>
    %682 = arith.index_cast %c7_i32 : i32 to index
    %c0_162 = arith.constant 0 : index
    %683 = vector.load %arg7[%682, %c0_162] : memref<8x128xf32, #tpu.memory_space<vmem>>, vector<1x128xf32>
    %684 = arith.maximumf %658, %662 : vector<1x128xf32>
    %685 = arith.maximumf %666, %671 : vector<1x128xf32>
    %cst_163 = arith.constant 0.699999988 : f32
    %686 = vector.broadcast %cst_163 : f32 to vector<1x128xf32>
    %687 = arith.mulf %686, %684 : vector<1x128xf32>
    %cst_164 = arith.constant 3.000000e-01 : f32
    %688 = vector.broadcast %cst_164 : f32 to vector<1x128xf32>
    %689 = arith.mulf %688, %685 : vector<1x128xf32>
    %690 = arith.addf %687, %689 : vector<1x128xf32>
    %cst_165 = arith.constant 3.000000e-01 : f32
    %691 = vector.broadcast %cst_165 : f32 to vector<1x128xf32>
    %692 = arith.mulf %691, %684 : vector<1x128xf32>
    %cst_166 = arith.constant 0.699999988 : f32
    %693 = vector.broadcast %cst_166 : f32 to vector<1x128xf32>
    %694 = arith.mulf %693, %685 : vector<1x128xf32>
    %695 = arith.addf %692, %694 : vector<1x128xf32>
    %696 = arith.mulf %5, %690 : vector<1x128xf32>
    %697 = arith.mulf %7, %652 : vector<1x128xf32>
    %698 = arith.addf %696, %697 : vector<1x128xf32>
    %699 = arith.mulf %5, %695 : vector<1x128xf32>
    %700 = arith.mulf %7, %655 : vector<1x128xf32>
    %701 = arith.addf %699, %700 : vector<1x128xf32>
    %c-100_i32_167 = arith.constant -100 : i32
    %702 = vector.broadcast %c-100_i32_167 : i32 to vector<1x128xi32>
    %703 = arith.cmpi ne, %677, %702 : vector<1x128xi32>
    %c-100_i32_168 = arith.constant -100 : i32
    %704 = vector.broadcast %c-100_i32_168 : i32 to vector<1x128xi32>
    %705 = arith.cmpi ne, %679, %704 : vector<1x128xi32>
    %706 = arith.andi %703, %705 : vector<1x128xi1>
    %c0_i32_169 = arith.constant 0 : i32
    %707 = vector.broadcast %c0_i32_169 : i32 to vector<1x128xi32>
    %708 = arith.cmpi eq, %681, %707 : vector<1x128xi32>
    %c0_i32_170 = arith.constant 0 : i32
    %709 = vector.broadcast %c0_i32_170 : i32 to vector<1x128xi32>
    %710 = arith.cmpi eq, %677, %709 : vector<1x128xi32>
    %c0_i32_171 = arith.constant 0 : i32
    %711 = vector.broadcast %c0_i32_171 : i32 to vector<1x128xi32>
    %712 = arith.cmpi eq, %679, %711 : vector<1x128xi32>
    %713 = arith.select %708, %658, %666 : vector<1x128xi1>, vector<1x128xf32>
    %714 = arith.select %708, %662, %671 : vector<1x128xi1>, vector<1x128xf32>
    %715 = arith.mulf %698, %11 : vector<1x128xf32>
    %716 = arith.mulf %673, %13 : vector<1x128xf32>
    %717 = arith.addf %715, %716 : vector<1x128xf32>
    %718 = arith.select %703, %717, %14 : vector<1x128xi1>, vector<1x128xf32>
    %719 = arith.mulf %701, %11 : vector<1x128xf32>
    %720 = arith.mulf %675, %13 : vector<1x128xf32>
    %721 = arith.addf %719, %720 : vector<1x128xf32>
    %722 = arith.select %703, %721, %14 : vector<1x128xi1>, vector<1x128xf32>
    %723 = arith.mulf %713, %11 : vector<1x128xf32>
    %724 = arith.select %703, %723, %14 : vector<1x128xi1>, vector<1x128xf32>
    %725 = arith.mulf %714, %11 : vector<1x128xf32>
    %726 = arith.select %703, %725, %14 : vector<1x128xi1>, vector<1x128xf32>
    %727 = arith.index_cast %c7_i32 : i32 to index
    %c0_172 = arith.constant 0 : index
    %728 = vector.load %arg8[%727, %c0_172] : memref<8x128xf32, #tpu.memory_space<vmem>>, vector<1x128xf32>
    tpu.vector_store %arg8[%727, %c0_172], %718 {strides = array<i32>} : memref<8x128xf32, #tpu.memory_space<vmem>>, vector<1x128xf32>,
    %729 = arith.index_cast %c7_i32 : i32 to index
    %c0_173 = arith.constant 0 : index
    %730 = vector.load %arg9[%729, %c0_173] : memref<8x128xf32, #tpu.memory_space<vmem>>, vector<1x128xf32>
    tpu.vector_store %arg9[%729, %c0_173], %722 {strides = array<i32>} : memref<8x128xf32, #tpu.memory_space<vmem>>, vector<1x128xf32>,
    %731 = arith.index_cast %c7_i32 : i32 to index
    %c0_174 = arith.constant 0 : index
    %732 = vector.load %arg10[%731, %c0_174] : memref<8x128xf32, #tpu.memory_space<vmem>>, vector<1x128xf32>
    tpu.vector_store %arg10[%731, %c0_174], %724 {strides = array<i32>} : memref<8x128xf32, #tpu.memory_space<vmem>>, vector<1x128xf32>,
    %733 = arith.index_cast %c7_i32 : i32 to index
    %c0_175 = arith.constant 0 : index
    %734 = vector.load %arg11[%733, %c0_175] : memref<8x128xf32, #tpu.memory_space<vmem>>, vector<1x128xf32>
    tpu.vector_store %arg11[%733, %c0_175], %726 {strides = array<i32>} : memref<8x128xf32, #tpu.memory_space<vmem>>, vector<1x128xf32>,
    %735 = arith.select %710, %652, %655 : vector<1x128xi1>, vector<1x128xf32>
    %736 = arith.select %712, %713, %714 : vector<1x128xi1>, vector<1x128xf32>
    %737 = arith.subf %736, %735 : vector<1x128xf32>
    %738 = arith.subf %683, %736 : vector<1x128xf32>
    %739 = arith.mulf %8, %737 : vector<1x128xf32>
    %740 = arith.addf %735, %739 : vector<1x128xf32>
    %741 = arith.mulf %10, %738 : vector<1x128xf32>
    %742 = arith.addf %740, %741 : vector<1x128xf32>
    %743 = arith.mulf %8, %738 : vector<1x128xf32>
    %744 = arith.addf %736, %743 : vector<1x128xf32>
    %745 = arith.andi %706, %710 : vector<1x128xi1>
    %746 = arith.select %745, %742, %652 : vector<1x128xi1>, vector<1x128xf32>
    %cst_176 = arith.constant dense<true> : vector<1x128xi1>
    %747 = arith.xori %710, %cst_176 : vector<1x128xi1>
    %748 = arith.andi %706, %747 : vector<1x128xi1>
    %749 = arith.select %748, %742, %655 : vector<1x128xi1>, vector<1x128xf32>
    %750 = arith.andi %706, %708 : vector<1x128xi1>
    %751 = arith.andi %750, %712 : vector<1x128xi1>
    %752 = arith.select %751, %744, %658 : vector<1x128xi1>, vector<1x128xf32>
    %753 = arith.andi %706, %708 : vector<1x128xi1>
    %cst_177 = arith.constant dense<true> : vector<1x128xi1>
    %754 = arith.xori %712, %cst_177 : vector<1x128xi1>
    %755 = arith.andi %753, %754 : vector<1x128xi1>
    %756 = arith.select %755, %744, %662 : vector<1x128xi1>, vector<1x128xf32>
    %cst_178 = arith.constant dense<true> : vector<1x128xi1>
    %757 = arith.xori %708, %cst_178 : vector<1x128xi1>
    %758 = arith.andi %706, %757 : vector<1x128xi1>
    %759 = arith.andi %758, %712 : vector<1x128xi1>
    %760 = arith.select %759, %744, %666 : vector<1x128xi1>, vector<1x128xf32>
    %cst_179 = arith.constant dense<true> : vector<1x128xi1>
    %761 = arith.xori %708, %cst_179 : vector<1x128xi1>
    %762 = arith.andi %706, %761 : vector<1x128xi1>
    %cst_180 = arith.constant dense<true> : vector<1x128xi1>
    %763 = arith.xori %712, %cst_180 : vector<1x128xi1>
    %764 = arith.andi %762, %763 : vector<1x128xi1>
    %765 = arith.select %764, %744, %671 : vector<1x128xi1>, vector<1x128xf32>
    %766 = arith.select %710, %15, %14 : vector<1x128xi1>, vector<1x128xf32>
    %767 = arith.select %703, %766, %673 : vector<1x128xi1>, vector<1x128xf32>
    %768 = arith.select %710, %14, %15 : vector<1x128xi1>, vector<1x128xf32>
    %769 = arith.select %703, %768, %675 : vector<1x128xi1>, vector<1x128xf32>
    %c8_i32 = arith.constant 8 : i32
    return
  }
  func.func @transform_0(%arg0: i32) -> i32 {
    %c0_i32 = arith.constant 0 : i32
    %c0_i32_0 = arith.constant 0 : i32
    return %c0_i32 : i32
  }
  func.func @transform_1(%arg0: i32) -> (i32, i32) {
    %c0_i32 = arith.constant 0 : i32
    %c0_i32_0 = arith.constant 0 : i32
    return %c0_i32, %arg0 : i32, i32
  }
  func.func @transform_2(%arg0: i32) -> (i32, i32) {
    %c0_i32 = arith.constant 0 : i32
    %c0_i32_0 = arith.constant 0 : i32
    return %c0_i32, %arg0 : i32, i32
  }
  func.func @transform_3(%arg0: i32) -> (i32, i32) {
    %c0_i32 = arith.constant 0 : i32
    %c0_i32_0 = arith.constant 0 : i32
    return %c0_i32, %arg0 : i32, i32
  }
  func.func @transform_4(%arg0: i32) -> (i32, i32) {
    %c0_i32 = arith.constant 0 : i32
    %c0_i32_0 = arith.constant 0 : i32
    return %c0_i32, %arg0 : i32, i32
  }
  func.func @transform_5(%arg0: i32) -> (i32, i32) {
    %c0_i32 = arith.constant 0 : i32
    %c0_i32_0 = arith.constant 0 : i32
    return %c0_i32, %arg0 : i32, i32
  }
  func.func @transform_6(%arg0: i32) -> (i32, i32) {
    %c0_i32 = arith.constant 0 : i32
    %c0_i32_0 = arith.constant 0 : i32
    return %c0_i32, %arg0 : i32, i32
  }
  func.func @transform_7(%arg0: i32) -> (i32, i32) {
    %c0_i32 = arith.constant 0 : i32
    %c0_i32_0 = arith.constant 0 : i32
    return %c0_i32, %arg0 : i32, i32
  }
  func.func @transform_8(%arg0: i32) -> (i32, i32) {
    %c0_i32 = arith.constant 0 : i32
    %c0_i32_0 = arith.constant 0 : i32
    return %c0_i32, %arg0 : i32, i32
  }
  func.func @transform_9(%arg0: i32) -> (i32, i32) {
    %c0_i32 = arith.constant 0 : i32
    %c0_i32_0 = arith.constant 0 : i32
    return %c0_i32, %arg0 : i32, i32
  }
  func.func @transform_10(%arg0: i32) -> (i32, i32) {
    %c0_i32 = arith.constant 0 : i32
    %c0_i32_0 = arith.constant 0 : i32
    return %c0_i32, %arg0 : i32, i32
  }
}

</mosaic_0001>

<llo_original>
// kernel: custom-call.2
$region0: #{custom-call.2}
  %s0 = inlined_call_operand.vmem [shape: s32[2], index: 0, kind: output, shape index: {}]

// kernel: dual_systems_forward.1
$region0: #{dual_systems_forward.1}
  #allocation0 [shape = 'u32[]', space=smem, size = 0x4, offset = 0x4, fixed_abs, tag = 'smem constant byte address 0x4 - core index']
  #allocation1 [shape = 'u32[144,128]{1,0:T(1,128)}', space=vmem, size = 0x12000, scoped, tag = 'internal scratch']
  %s0 = inlined_call_operand.vmem [shape: f32[5], index: 0, kind: input, shape index: {}]
  %s1 = inlined_call_operand.vmem [shape: f32[1,128], index: 1, kind: input, shape index: {}]
  %s2 = inlined_call_operand.vmem [shape: f32[1,128], index: 2, kind: input, shape index: {}]
  %s3 = inlined_call_operand.vmem [shape: s32[8,128], index: 3, kind: input, shape index: {}]
  %s4 = inlined_call_operand.vmem [shape: s32[8,128], index: 4, kind: input, shape index: {}]
  %s5 = inlined_call_operand.vmem [shape: s32[8,128], index: 5, kind: input, shape index: {}]
  %s6 = inlined_call_operand.vmem [shape: f32[8,128], index: 6, kind: input, shape index: {}]
  %s7 = inlined_call_operand.vmem [shape: f32[8,128], index: 7, kind: output, shape index: {0}]
  %s8 = inlined_call_operand.vmem [shape: f32[8,128], index: 8, kind: output, shape index: {1}]
  %s9 = inlined_call_operand.vmem [shape: f32[8,128], index: 9, kind: output, shape index: {2}]
  %s10 = inlined_call_operand.vmem [shape: f32[8,128], index: 10, kind: output, shape index: {3}]
  %11 = xla_tuple %s7, %s8, %s9, %s10
  %s12 = sld [smem:[#allocation0]]
  $region66: #{dual_systems_forward.1} parent=0
    _
  %s14 = ssub.s32 1, %s12
  %s15 = scalar_select 0, %s14, %s12
  $region1: #{dual_systems_forward.1} parent=0
    #allocation2 [shape = 'u8[512]{0}', space=smem, size = 0x200, scoped, tag = 'input window, operand 0, single buffered']
    #allocation3 [shape = 's32[1]{0}', space=sflag, size = 0x4, scoped, tag = 'scoped memory for dual_systems_forward.1']
    %16 = vsyncpa [#allocation3], 0
    // Predicated region
    $region2: #{dual_systems_forward.1} parent=1 // pred_check
      _
    $region3: #{dual_systems_forward.1} parent=1 // pred_check_branch
      %18 = sbr.rel (0) target = $region5
    $region4: #{dual_systems_forward.1} parent=1 // pred_region
      %s20 = ssub.s32 16, 16
      %21 = vsyncadd [#allocation3], %s20
      %s23 = sshll.u32 %s0, 4
      %s24 = int_to_ptr.vmem [resolvable:$true] %s23
      %26 = dma.vmem_to_smem %s24, 16, [#allocation2], [#allocation3]
    $region5: #{dual_systems_forward.1} parent=1 // pred_fallthru
      _
    // Predicated region
    $region6: #{dual_systems_forward.1} parent=1 // pred_check
      _
    $region7: #{dual_systems_forward.1} parent=1 // pred_check_branch
      %28 = sbr.rel (0) target = $region9
    $region8: #{dual_systems_forward.1} parent=1 // pred_region
      _
    $region9: #{dual_systems_forward.1} parent=1 // pred_fallthru
      _
    // Predicated region
    $region10: #{dual_systems_forward.1} parent=1 // pred_check
      _
    $region11: #{dual_systems_forward.1} parent=1 // pred_check_branch
      %30 = sbr.rel (0) target = $region13
    $region12: #{dual_systems_forward.1} parent=1 // pred_region
      _
    $region13: #{dual_systems_forward.1} parent=1 // pred_fallthru
      _
    // Predicated region
    $region14: #{dual_systems_forward.1} parent=1 // pred_check
      _
    $region15: #{dual_systems_forward.1} parent=1 // pred_check_branch
      %32 = sbr.rel (0) target = $region17
    $region16: #{dual_systems_forward.1} parent=1 // pred_region
      _
    $region17: #{dual_systems_forward.1} parent=1 // pred_fallthru
      _
    // Predicated region
    $region18: #{dual_systems_forward.1} parent=1 // pred_check
      _
    $region19: #{dual_systems_forward.1} parent=1 // pred_check_branch
      %34 = sbr.rel (0) target = $region21
    $region20: #{dual_systems_forward.1} parent=1 // pred_region
      _
    $region21: #{dual_systems_forward.1} parent=1 // pred_fallthru
      _
    // Predicated region
    $region22: #{dual_systems_forward.1} parent=1 // pred_check
      _
    $region23: #{dual_systems_forward.1} parent=1 // pred_check_branch
      %36 = sbr.rel (0) target = $region25
    $region24: #{dual_systems_forward.1} parent=1 // pred_region
      _
    $region25: #{dual_systems_forward.1} parent=1 // pred_fallthru
      _
    // Predicated region
    $region26: #{dual_systems_forward.1} parent=1 // pred_check
      _
    $region27: #{dual_systems_forward.1} parent=1 // pred_check_branch
      %38 = sbr.rel (0) target = $region29
    $region28: #{dual_systems_forward.1} parent=1 // pred_region
      _
    $region29: #{dual_systems_forward.1} parent=1 // pred_fallthru
      _
    // Predicated region
    $region30: #{dual_systems_forward.1} parent=1 // pred_check
      _
    $region31: #{dual_systems_forward.1} parent=1 // pred_check_branch
      %40 = sbr.rel (0) target = $region33
    $region32: #{dual_systems_forward.1} parent=1 // pred_region
      %41 = dma.done [#allocation3], 16
    $region33: #{dual_systems_forward.1} parent=1 // pred_fallthru
      _
    %42 = sfence
    %s43 = sld [smem:[#allocation2]]
    %s44 = sld [smem:[#allocation2 + $0x1]]
    %s45 = sld [smem:[#allocation2 + $0x2]]
    %s46 = sld [smem:[#allocation2 + $0x3]]
    %s47 = sld [smem:[#allocation2 + $0x4]]
    %v48 = vstv %s43
    %s49 = ssub.f32 1.0, %s43
    %v50 = vstv %s49
    %v51 = vstv %s44
    %s52 = smul.f32 %s45, %s44
    %v53 = vstv %s52
    %v54 = vstv %s47
    %s55 = smul.f32 %s46, %s47
    %v56 = vstv %s55
    %v57 = vld [vmem:[%s1] sm:$0x1]
    %v58 = vld [vmem:[%s2] sm:$0x1]
    %v59 = vld [vmem:[%s3] sm:$0x1]
    %v60 = vld [vmem:[%s4] sm:$0x1]
    %v61 = vld [vmem:[%s5] sm:$0x1]
    %v62 = vld [vmem:[%s6] sm:$0x1]
    %v63 = vmul.f32 %v48, 0.0
    %v64 = vmul.f32 %v50, 0.0
    %v65 = vadd.f32 %v63, %v64
    %vm66 = vcmp.ne.s32.totalorder %v59, 4294967196
    %vm67 = vcmp.ne.s32.totalorder %v60, 4294967196
    %vm68 = vmand %vm66, %vm67
    %vm69 = vcmp.eq.s32.totalorder %v61, 0
    %vm70 = vcmp.eq.s32.totalorder %v59, 0
    %vm71 = vcmp.eq.s32.totalorder %v60, 0
    %v72 = vmul.f32 %v65, %v54
    %v73 = vmul.f32 %v57, %v56
    %v74 = vadd.f32 %v72, %v73
    %v75 = vsel %vm66, %v74, 0.0
    %v76 = vmul.f32 %v58, %v56
    %v77 = vadd.f32 %v72, %v76
    %v78 = vsel %vm66, %v77, 0.0
    %v79 = vmul.f32 %v54, 0.0
    %v80 = vsel %vm66, %v79, 0.0
    %81 = vst [vmem:[%s7] sm:$0x1] %v75
    %82 = vst [vmem:[%s8] sm:$0x1] %v78
    %83 = vst [vmem:[%s9] sm:$0x1] %v80
    %84 = vst [vmem:[%s10] sm:$0x1] %v80
    %v85 = vmul.f32 %v51, 0.0
    %v86 = vadd.f32 %v85, 0.0
    %v87 = vmul.f32 %v53, %v62
    %v88 = vadd.f32 %v86, %v87
    %v89 = vmul.f32 %v51, %v62
    %v90 = vadd.f32 %v89, 0.0
    %vm91 = vmand %vm68, %vm70
    %v92 = vsel %vm91, %v88, 0.0
    %vm93 = vmxor %vm70, 1
    %vm94 = vmand %vm68, %vm93
    %v95 = vsel %vm94, %v88, 0.0
    %vm96 = vmand %vm68, %vm69
    %vm97 = vmand %vm96, %vm71
    %v98 = vsel %vm97, %v90, 0.0
    %vm99 = vmxor %vm71, 1
    %vm100 = vmand %vm96, %vm99
    %v101 = vsel %vm100, %v90, 0.0
    %vm102 = vmxor %vm69, 1
    %vm103 = vmand %vm68, %vm102
    %vm104 = vmand %vm103, %vm71
    %v105 = vsel %vm104, %v90, 0.0
    %vm106 = vmand %vm103, %vm99
    %v107 = vsel %vm106, %v90, 0.0
    %v108 = vsel %vm70, 1.0, 0.0
    %v109 = vsel %vm66, %v108, %v57
    %v110 = vsel %vm70, 0.0, 1.0
    %v111 = vsel %vm66, %v110, %v58
    %v112 = vld [vmem:[%s3 + $0x1] sm:$0x1]
    %v113 = vld [vmem:[%s4 + $0x1] sm:$0x1]
    %v114 = vld [vmem:[%s5 + $0x1] sm:$0x1]
    %v115 = vld [vmem:[%s6 + $0x1] sm:$0x1]
    %v116 = vmax.f32 %v98, %v101
    %v117 = vmax.f32 %v105, %v107
    %v118 = vmul.f32 %v116, 0.7
    %v119 = vmul.f32 %v117, 0.3
    %v120 = vadd.f32 %v118, %v119
    %v121 = vmul.f32 %v116, 0.3
    %v122 = vmul.f32 %v117, 0.7
    %v123 = vadd.f32 %v121, %v122
    %v124 = vmul.f32 %v48, %v120
    %v125 = vmul.f32 %v50, %v92
    %v126 = vadd.f32 %v124, %v125
    %v127 = vmul.f32 %v48, %v123
    %v128 = vmul.f32 %v50, %v95
    %v129 = vadd.f32 %v127, %v128
    %vm130 = vcmp.ne.s32.totalorder %v112, 4294967196
    %vm131 = vcmp.ne.s32.totalorder %v113, 4294967196
    %vm132 = vmand %vm130, %vm131
    %vm133 = vcmp.eq.s32.totalorder %v114, 0
    %vm134 = vcmp.eq.s32.totalorder %v112, 0
    %vm135 = vcmp.eq.s32.totalorder %v113, 0
    %v136 = vsel %vm133, %v98, %v105
    %v137 = vsel %vm133, %v101, %v107
    %v138 = vmul.f32 %v126, %v54
    %v139 = vmul.f32 %v109, %v56
    %v140 = vadd.f32 %v138, %v139
    %v141 = vsel %vm130, %v140, 0.0
    %v142 = vmul.f32 %v129, %v54
    %v143 = vmul.f32 %v111, %v56
    %v144 = vadd.f32 %v142, %v143
    %v145 = vsel %vm130, %v144, 0.0
    %v146 = vmul.f32 %v136, %v54
    %v147 = vsel %vm130, %v146, 0.0
    %v148 = vmul.f32 %v137, %v54
    %v149 = vsel %vm130, %v148, 0.0
    %150 = vst [vmem:[%s7 + $0x1] sm:$0x1] %v141
    %151 = vst [vmem:[%s8 + $0x1] sm:$0x1] %v145
    %152 = vst [vmem:[%s9 + $0x1] sm:$0x1] %v147
    %153 = vst [vmem:[%s10 + $0x1] sm:$0x1] %v149
    %v154 = vsel %vm134, %v92, %v95
    %v155 = vsel %vm135, %v136, %v137
    %v156 = vsub.f32 %v155, %v154
    %v157 = vsub.f32 %v115, %v155
    %v158 = vmul.f32 %v51, %v156
    %v159 = vadd.f32 %v154, %v158
    %v160 = vmul.f32 %v53, %v157
    %v161 = vadd.f32 %v159, %v160
    %v162 = vmul.f32 %v51, %v157
    %v163 = vadd.f32 %v155, %v162
    %vm164 = vmand %vm132, %vm134
    %v165 = vsel %vm164, %v161, %v92
    %vm166 = vmxor %vm134, 1
    %vm167 = vmand %vm132, %vm166
    %v168 = vsel %vm167, %v161, %v95
    %vm169 = vmand %vm132, %vm133
    %vm170 = vmand %vm169, %vm135
    %v171 = vsel %vm170, %v163, %v98
    %vm172 = vmxor %vm135, 1
    %vm173 = vmand %vm169, %vm172
    %v174 = vsel %vm173, %v163, %v101
    %vm175 = vmxor %vm133, 1
    %vm176 = vmand %vm132, %vm175
    %vm177 = vmand %vm176, %vm135
    %v178 = vsel %vm177, %v163, %v105
    %vm179 = vmand %vm176, %vm172
    %v180 = vsel %vm179, %v163, %v107
    %v181 = vsel %vm134, 1.0, 0.0
    %v182 = vsel %vm130, %v181, %v109
    %v183 = vsel %vm134, 0.0, 1.0
    %v184 = vsel %vm130, %v183, %v111
    %v185 = vld [vmem:[%s3 + $0x2] sm:$0x1]
    %v186 = vld [vmem:[%s4 + $0x2] sm:$0x1]
    %v187 = vld [vmem:[%s5 + $0x2] sm:$0x1]
    %v188 = vld [vmem:[%s6 + $0x2] sm:$0x1]
    %v189 = vmax.f32 %v171, %v174
    %v190 = vmax.f32 %v178, %v180
    %v191 = vmul.f32 %v189, 0.7
    %v192 = vmul.f32 %v190, 0.3
    %v193 = vadd.f32 %v191, %v192
    %v194 = vmul.f32 %v189, 0.3
    %v195 = vmul.f32 %v190, 0.7
    %v196 = vadd.f32 %v194, %v195
    %v197 = vmul.f32 %v48, %v193
    %v198 = vmul.f32 %v50, %v165
    %v199 = vadd.f32 %v197, %v198
    %v200 = vmul.f32 %v48, %v196
    %v201 = vmul.f32 %v50, %v168
    %v202 = vadd.f32 %v200, %v201
    %vm203 = vcmp.ne.s32.totalorder %v185, 4294967196
    %vm204 = vcmp.ne.s32.totalorder %v186, 4294967196
    %vm205 = vmand %vm203, %vm204
    %vm206 = vcmp.eq.s32.totalorder %v187, 0
    %vm207 = vcmp.eq.s32.totalorder %v185, 0
    %vm208 = vcmp.eq.s32.totalorder %v186, 0
    %v209 = vsel %vm206, %v171, %v178
    %v210 = vsel %vm206, %v174, %v180
    %v211 = vmul.f32 %v199, %v54
    %v212 = vmul.f32 %v182, %v56
    %v213 = vadd.f32 %v211, %v212
    %v214 = vsel %vm203, %v213, 0.0
    %v215 = vmul.f32 %v202, %v54
    %v216 = vmul.f32 %v184, %v56
    %v217 = vadd.f32 %v215, %v216
    %v218 = vsel %vm203, %v217, 0.0
    %v219 = vmul.f32 %v209, %v54
    %v220 = vsel %vm203, %v219, 0.0
    %v221 = vmul.f32 %v210, %v54
    %v222 = vsel %vm203, %v221, 0.0
    %223 = vst [vmem:[%s7 + $0x2] sm:$0x1] %v214
    %224 = vst [vmem:[%s8 + $0x2] sm:$0x1] %v218
    %225 = vst [vmem:[%s9 + $0x2] sm:$0x1] %v220
    %226 = vst [vmem:[%s10 + $0x2] sm:$0x1] %v222
    %v227 = vsel %vm207, %v165, %v168
    %v228 = vsel %vm208, %v209, %v210
    %v229 = vsub.f32 %v228, %v227
    %v230 = vsub.f32 %v188, %v228
    %v231 = vmul.f32 %v51, %v229
    %v232 = vadd.f32 %v227, %v231
    %v233 = vmul.f32 %v53, %v230
    %v234 = vadd.f32 %v232, %v233
    %v235 = vmul.f32 %v51, %v230
    %v236 = vadd.f32 %v228, %v235
    %vm237 = vmand %vm205, %vm207
    %v238 = vsel %vm237, %v234, %v165
    %vm239 = vmxor %vm207, 1
    %vm240 = vmand %vm205, %vm239
    %v241 = vsel %vm240, %v234, %v168
    %vm242 = vmand %vm205, %vm206
    %vm243 = vmand %vm242, %vm208
    %v244 = vsel %vm243, %v236, %v171
    %vm245 = vmxor %vm208, 1
    %vm246 = vmand %vm242, %vm245
    %v247 = vsel %vm246, %v236, %v174
    %vm248 = vmxor %vm206, 1
    %vm249 = vmand %vm205, %vm248
    %vm250 = vmand %vm249, %vm208
    %v251 = vsel %vm250, %v236, %v178
    %vm252 = vmand %vm249, %vm245
    %v253 = vsel %vm252, %v236, %v180
    %v254 = vsel %vm207, 1.0, 0.0
    %v255 = vsel %vm203, %v254, %v182
    %v256 = vsel %vm207, 0.0, 1.0
    %v257 = vsel %vm203, %v256, %v184
    %v258 = vld [vmem:[%s3 + $0x3] sm:$0x1]
    %v259 = vld [vmem:[%s4 + $0x3] sm:$0x1]
    %v260 = vld [vmem:[%s5 + $0x3] sm:$0x1]
    %v261 = vld [vmem:[%s6 + $0x3] sm:$0x1]
    %v262 = vmax.f32 %v244, %v247
    %v263 = vmax.f32 %v251, %v253
    %v264 = vmul.f32 %v262, 0.7
    %v265 = vmul.f32 %v263, 0.3
    %v266 = vadd.f32 %v264, %v265
    %v267 = vmul.f32 %v262, 0.3
    %v268 = vmul.f32 %v263, 0.7
    %v269 = vadd.f32 %v267, %v268
    %v270 = vmul.f32 %v48, %v266
    %v271 = vmul.f32 %v50, %v238
    %v272 = vadd.f32 %v270, %v271
    %v273 = vmul.f32 %v48, %v269
    %v274 = vmul.f32 %v50, %v241
    %v275 = vadd.f32 %v273, %v274
    %vm276 = vcmp.ne.s32.totalorder %v258, 4294967196
    %vm277 = vcmp.ne.s32.totalorder %v259, 4294967196
    %vm278 = vmand %vm276, %vm277
    %vm279 = vcmp.eq.s32.totalorder %v260, 0
    %vm280 = vcmp.eq.s32.totalorder %v258, 0
    %vm281 = vcmp.eq.s32.totalorder %v259, 0
    %v282 = vsel %vm279, %v244, %v251
    %v283 = vsel %vm279, %v247, %v253
    %v284 = vmul.f32 %v272, %v54
    %v285 = vmul.f32 %v255, %v56
    %v286 = vadd.f32 %v284, %v285
    %v287 = vsel %vm276, %v286, 0.0
    %v288 = vmul.f32 %v275, %v54
    %v289 = vmul.f32 %v257, %v56
    %v290 = vadd.f32 %v288, %v289
    %v291 = vsel %vm276, %v290, 0.0
    %v292 = vmul.f32 %v282, %v54
    %v293 = vsel %vm276, %v292, 0.0
    %v294 = vmul.f32 %v283, %v54
    %v295 = vsel %vm276, %v294, 0.0
    %296 = vst [vmem:[%s7 + $0x3] sm:$0x1] %v287
    %297 = vst [vmem:[%s8 + $0x3] sm:$0x1] %v291
    %298 = vst [vmem:[%s9 + $0x3] sm:$0x1] %v293
    %299 = vst [vmem:[%s10 + $0x3] sm:$0x1] %v295
    %v300 = vsel %vm280, %v238, %v241
    %v301 = vsel %vm281, %v282, %v283
    %v302 = vsub.f32 %v301, %v300
    %v303 = vsub.f32 %v261, %v301
    %v304 = vmul.f32 %v51, %v302
    %v305 = vadd.f32 %v300, %v304
    %v306 = vmul.f32 %v53, %v303
    %v307 = vadd.f32 %v305, %v306
    %v308 = vmul.f32 %v51, %v303
    %v309 = vadd.f32 %v301, %v308
    %vm310 = vmand %vm278, %vm280
    %v311 = vsel %vm310, %v307, %v238
    %vm312 = vmxor %vm280, 1
    %vm313 = vmand %vm278, %vm312
    %v314 = vsel %vm313, %v307, %v241
    %vm315 = vmand %vm278, %vm279
    %vm316 = vmand %vm315, %vm281
    %v317 = vsel %vm316, %v309, %v244
    %vm318 = vmxor %vm281, 1
    %vm319 = vmand %vm315, %vm318
    %v320 = vsel %vm319, %v309, %v247
    %vm321 = vmxor %vm279, 1
    %vm322 = vmand %vm278, %vm321
    %vm323 = vmand %vm322, %vm281
    %v324 = vsel %vm323, %v309, %v251
    %vm325 = vmand %vm322, %vm318
    %v326 = vsel %vm325, %v309, %v253
    %v327 = vsel %vm280, 1.0, 0.0
    %v328 = vsel %vm276, %v327, %v255
    %v329 = vsel %vm280, 0.0, 1.0
    %v330 = vsel %vm276, %v329, %v257
    %v331 = vld [vmem:[%s3 + $0x4] sm:$0x1]
    %v332 = vld [vmem:[%s4 + $0x4] sm:$0x1]
    %v333 = vld [vmem:[%s5 + $0x4] sm:$0x1]
    %v334 = vld [vmem:[%s6 + $0x4] sm:$0x1]
    %v335 = vmax.f32 %v317, %v320
    %v336 = vmax.f32 %v324, %v326
    %v337 = vmul.f32 %v335, 0.7
    %v338 = vmul.f32 %v336, 0.3
    %v339 = vadd.f32 %v337, %v338
    %v340 = vmul.f32 %v335, 0.3
    %v341 = vmul.f32 %v336, 0.7
    %v342 = vadd.f32 %v340, %v341
    %v343 = vmul.f32 %v48, %v339
    %v344 = vmul.f32 %v50, %v311
    %v345 = vadd.f32 %v343, %v344
    %v346 = vmul.f32 %v48, %v342
    %v347 = vmul.f32 %v50, %v314
    %v348 = vadd.f32 %v346, %v347
    %vm349 = vcmp.ne.s32.totalorder %v331, 4294967196
    %vm350 = vcmp.ne.s32.totalorder %v332, 4294967196
    %vm351 = vmand %vm349, %vm350
    %vm352 = vcmp.eq.s32.totalorder %v333, 0
    %vm353 = vcmp.eq.s32.totalorder %v331, 0
    %vm354 = vcmp.eq.s32.totalorder %v332, 0
    %v355 = vsel %vm352, %v317, %v324
    %v356 = vsel %vm352, %v320, %v326
    %v357 = vmul.f32 %v345, %v54
    %v358 = vmul.f32 %v328, %v56
    %v359 = vadd.f32 %v357, %v358
    %v360 = vsel %vm349, %v359, 0.0
    %v361 = vmul.f32 %v348, %v54
    %v362 = vmul.f32 %v330, %v56
    %v363 = vadd.f32 %v361, %v362
    %v364 = vsel %vm349, %v363, 0.0
    %v365 = vmul.f32 %v355, %v54
    %v366 = vsel %vm349, %v365, 0.0
    %v367 = vmul.f32 %v356, %v54
    %v368 = vsel %vm349, %v367, 0.0
    %369 = vst [vmem:[%s7 + $0x4] sm:$0x1] %v360
    %370 = vst [vmem:[%s8 + $0x4] sm:$0x1] %v364
    %371 = vst [vmem:[%s9 + $0x4] sm:$0x1] %v366
    %372 = vst [vmem:[%s10 + $0x4] sm:$0x1] %v368
    %v373 = vsel %vm353, %v311, %v314
    %v374 = vsel %vm354, %v355, %v356
    %v375 = vsub.f32 %v374, %v373
    %v376 = vsub.f32 %v334, %v374
    %v377 = vmul.f32 %v51, %v375
    %v378 = vadd.f32 %v373, %v377
    %v379 = vmul.f32 %v53, %v376
    %v380 = vadd.f32 %v378, %v379
    %v381 = vmul.f32 %v51, %v376
    %v382 = vadd.f32 %v374, %v381
    %vm383 = vmand %vm351, %vm353
    %v384 = vsel %vm383, %v380, %v311
    %vm385 = vmxor %vm353, 1
    %vm386 = vmand %vm351, %vm385
    %v387 = vsel %vm386, %v380, %v314
    %vm388 = vmand %vm351, %vm352
    %vm389 = vmand %vm388, %vm354
    %v390 = vsel %vm389, %v382, %v317
    %vm391 = vmxor %vm354, 1
    %vm392 = vmand %vm388, %vm391
    %v393 = vsel %vm392, %v382, %v320
    %vm394 = vmxor %vm352, 1
    %vm395 = vmand %vm351, %vm394
    %vm396 = vmand %vm395, %vm354
    %v397 = vsel %vm396, %v382, %v324
    %vm398 = vmand %vm395, %vm391
    %v399 = vsel %vm398, %v382, %v326
    %v400 = vsel %vm353, 1.0, 0.0
    %v401 = vsel %vm349, %v400, %v328
    %v402 = vsel %vm353, 0.0, 1.0
    %v403 = vsel %vm349, %v402, %v330
    %v404 = vld [vmem:[%s3 + $0x5] sm:$0x1]
    %v405 = vld [vmem:[%s4 + $0x5] sm:$0x1]
    %v406 = vld [vmem:[%s5 + $0x5] sm:$0x1]
    %v407 = vld [vmem:[%s6 + $0x5] sm:$0x1]
    %v408 = vmax.f32 %v390, %v393
    %v409 = vmax.f32 %v397, %v399
    %v410 = vmul.f32 %v408, 0.7
    %v411 = vmul.f32 %v409, 0.3
    %v412 = vadd.f32 %v410, %v411
    %v413 = vmul.f32 %v408, 0.3
    %v414 = vmul.f32 %v409, 0.7
    %v415 = vadd.f32 %v413, %v414
    %v416 = vmul.f32 %v48, %v412
    %v417 = vmul.f32 %v50, %v384
    %v418 = vadd.f32 %v416, %v417
    %v419 = vmul.f32 %v48, %v415
    %v420 = vmul.f32 %v50, %v387
    %v421 = vadd.f32 %v419, %v420
    %vm422 = vcmp.ne.s32.totalorder %v404, 4294967196
    %vm423 = vcmp.ne.s32.totalorder %v405, 4294967196
    %vm424 = vmand %vm422, %vm423
    %vm425 = vcmp.eq.s32.totalorder %v406, 0
    %vm426 = vcmp.eq.s32.totalorder %v404, 0
    %vm427 = vcmp.eq.s32.totalorder %v405, 0
    %v428 = vsel %vm425, %v390, %v397
    %v429 = vsel %vm425, %v393, %v399
    %v430 = vmul.f32 %v418, %v54
    %v431 = vmul.f32 %v401, %v56
    %v432 = vadd.f32 %v430, %v431
    %v433 = vsel %vm422, %v432, 0.0
    %v434 = vmul.f32 %v421, %v54
    %v435 = vmul.f32 %v403, %v56
    %v436 = vadd.f32 %v434, %v435
    %v437 = vsel %vm422, %v436, 0.0
    %v438 = vmul.f32 %v428, %v54
    %v439 = vsel %vm422, %v438, 0.0
    %v440 = vmul.f32 %v429, %v54
    %v441 = vsel %vm422, %v440, 0.0
    %442 = vst [vmem:[%s7 + $0x5] sm:$0x1] %v433
    %443 = vst [vmem:[%s8 + $0x5] sm:$0x1] %v437
    %444 = vst [vmem:[%s9 + $0x5] sm:$0x1] %v439
    %445 = vst [vmem:[%s10 + $0x5] sm:$0x1] %v441
    %v446 = vsel %vm426, %v384, %v387
    %v447 = vsel %vm427, %v428, %v429
    %v448 = vsub.f32 %v447, %v446
    %v449 = vsub.f32 %v407, %v447
    %v450 = vmul.f32 %v51, %v448
    %v451 = vadd.f32 %v446, %v450
    %v452 = vmul.f32 %v53, %v449
    %v453 = vadd.f32 %v451, %v452
    %v454 = vmul.f32 %v51, %v449
    %v455 = vadd.f32 %v447, %v454
    %vm456 = vmand %vm424, %vm426
    %v457 = vsel %vm456, %v453, %v384
    %vm458 = vmxor %vm426, 1
    %vm459 = vmand %vm424, %vm458
    %v460 = vsel %vm459, %v453, %v387
    %vm461 = vmand %vm424, %vm425
    %vm462 = vmand %vm461, %vm427
    %v463 = vsel %vm462, %v455, %v390
    %vm464 = vmxor %vm427, 1
    %vm465 = vmand %vm461, %vm464
    %v466 = vsel %vm465, %v455, %v393
    %vm467 = vmxor %vm425, 1
    %vm468 = vmand %vm424, %vm467
    %vm469 = vmand %vm468, %vm427
    %v470 = vsel %vm469, %v455, %v397
    %vm471 = vmand %vm468, %vm464
    %v472 = vsel %vm471, %v455, %v399
    %v473 = vsel %vm426, 1.0, 0.0
    %v474 = vsel %vm422, %v473, %v401
    %v475 = vsel %vm426, 0.0, 1.0
    %v476 = vsel %vm422, %v475, %v403
    %v477 = vld [vmem:[%s3 + $0x6] sm:$0x1]
    %v478 = vld [vmem:[%s4 + $0x6] sm:$0x1]
    %v479 = vld [vmem:[%s5 + $0x6] sm:$0x1]
    %v480 = vld [vmem:[%s6 + $0x6] sm:$0x1]
    %v481 = vmax.f32 %v463, %v466
    %v482 = vmax.f32 %v470, %v472
    %v483 = vmul.f32 %v481, 0.7
    %v484 = vmul.f32 %v482, 0.3
    %v485 = vadd.f32 %v483, %v484
    %v486 = vmul.f32 %v481, 0.3
    %v487 = vmul.f32 %v482, 0.7
    %v488 = vadd.f32 %v486, %v487
    %v489 = vmul.f32 %v48, %v485
    %v490 = vmul.f32 %v50, %v457
    %v491 = vadd.f32 %v489, %v490
    %v492 = vmul.f32 %v48, %v488
    %v493 = vmul.f32 %v50, %v460
    %v494 = vadd.f32 %v492, %v493
    %vm495 = vcmp.ne.s32.totalorder %v477, 4294967196
    %vm496 = vcmp.ne.s32.totalorder %v478, 4294967196
    %vm497 = vmand %vm495, %vm496
    %vm498 = vcmp.eq.s32.totalorder %v479, 0
    %vm499 = vcmp.eq.s32.totalorder %v477, 0
    %vm500 = vcmp.eq.s32.totalorder %v478, 0
    %v501 = vsel %vm498, %v463, %v470
    %v502 = vsel %vm498, %v466, %v472
    %v503 = vmul.f32 %v491, %v54
    %v504 = vmul.f32 %v474, %v56
    %v505 = vadd.f32 %v503, %v504
    %v506 = vsel %vm495, %v505, 0.0
    %v507 = vmul.f32 %v494, %v54
    %v508 = vmul.f32 %v476, %v56
    %v509 = vadd.f32 %v507, %v508
    %v510 = vsel %vm495, %v509, 0.0
    %v511 = vmul.f32 %v501, %v54
    %v512 = vsel %vm495, %v511, 0.0
    %v513 = vmul.f32 %v502, %v54
    %v514 = vsel %vm495, %v513, 0.0
    %515 = vst [vmem:[%s7 + $0x6] sm:$0x1] %v506
    %516 = vst [vmem:[%s8 + $0x6] sm:$0x1] %v510
    %517 = vst [vmem:[%s9 + $0x6] sm:$0x1] %v512
    %518 = vst [vmem:[%s10 + $0x6] sm:$0x1] %v514
    %v519 = vsel %vm499, %v457, %v460
    %v520 = vsel %vm500, %v501, %v502
    %v521 = vsub.f32 %v520, %v519
    %v522 = vsub.f32 %v480, %v520
    %v523 = vmul.f32 %v51, %v521
    %v524 = vadd.f32 %v519, %v523
    %v525 = vmul.f32 %v53, %v522
    %v526 = vadd.f32 %v524, %v525
    %v527 = vmul.f32 %v51, %v522
    %v528 = vadd.f32 %v520, %v527
    %vm529 = vmand %vm497, %vm499
    %v530 = vsel %vm529, %v526, %v457
    %vm531 = vmxor %vm499, 1
    %vm532 = vmand %vm497, %vm531
    %v533 = vsel %vm532, %v526, %v460
    %vm534 = vmand %vm497, %vm498
    %vm535 = vmand %vm534, %vm500
    %v536 = vsel %vm535, %v528, %v463
    %vm537 = vmxor %vm500, 1
    %vm538 = vmand %vm534, %vm537
    %v539 = vsel %vm538, %v528, %v466
    %vm540 = vmxor %vm498, 1
    %vm541 = vmand %vm497, %vm540
    %vm542 = vmand %vm541, %vm500
    %v543 = vsel %vm542, %v528, %v470
    %vm544 = vmand %vm541, %vm537
    %v545 = vsel %vm544, %v528, %v472
    %v546 = vsel %vm499, 1.0, 0.0
    %v547 = vsel %vm495, %v546, %v474
    %v548 = vsel %vm499, 0.0, 1.0
    %v549 = vsel %vm495, %v548, %v476
    %v550 = vld [vmem:[%s3 + $0x7] sm:$0x1]
    %v551 = vld [vmem:[%s5 + $0x7] sm:$0x1]
    %v552 = vmax.f32 %v536, %v539
    %v553 = vmax.f32 %v543, %v545
    %v554 = vmul.f32 %v552, 0.7
    %v555 = vmul.f32 %v553, 0.3
    %v556 = vadd.f32 %v554, %v555
    %v557 = vmul.f32 %v552, 0.3
    %v558 = vmul.f32 %v553, 0.7
    %v559 = vadd.f32 %v557, %v558
    %v560 = vmul.f32 %v48, %v556
    %v561 = vmul.f32 %v50, %v530
    %v562 = vadd.f32 %v560, %v561
    %v563 = vmul.f32 %v48, %v559
    %v564 = vmul.f32 %v50, %v533
    %v565 = vadd.f32 %v563, %v564
    %vm566 = vcmp.ne.s32.totalorder %v550, 4294967196
    %vm567 = vcmp.eq.s32.totalorder %v551, 0
    %v568 = vsel %vm567, %v536, %v543
    %v569 = vsel %vm567, %v539, %v545
    %v570 = vmul.f32 %v562, %v54
    %v571 = vmul.f32 %v547, %v56
    %v572 = vadd.f32 %v570, %v571
    %v573 = vsel %vm566, %v572, 0.0
    %v574 = vmul.f32 %v565, %v54
    %v575 = vmul.f32 %v549, %v56
    %v576 = vadd.f32 %v574, %v575
    %v577 = vsel %vm566, %v576, 0.0
    %v578 = vmul.f32 %v568, %v54
    %v579 = vsel %vm566, %v578, 0.0
    %v580 = vmul.f32 %v569, %v54
    %v581 = vsel %vm566, %v580, 0.0
    %582 = vst [vmem:[%s7 + $0x7] sm:$0x1] %v573
    %583 = vst [vmem:[%s8 + $0x7] sm:$0x1] %v577
    %584 = vst [vmem:[%s9 + $0x7] sm:$0x1] %v579
    %585 = vst [vmem:[%s10 + $0x7] sm:$0x1] %v581
    // Predicated region
    $region34: #{dual_systems_forward.1} parent=1 // pred_check
      _
    $region35: #{dual_systems_forward.1} parent=1 // pred_check_branch
      %587 = sbr.rel (0) target = $region37
    $region36: #{dual_systems_forward.1} parent=1 // pred_region
      _
    $region37: #{dual_systems_forward.1} parent=1 // pred_fallthru
      _
    // Predicated region
    $region38: #{dual_systems_forward.1} parent=1 // pred_check
      _
    $region39: #{dual_systems_forward.1} parent=1 // pred_check_branch
      %589 = sbr.rel (0) target = $region41
    $region40: #{dual_systems_forward.1} parent=1 // pred_region
      _
    $region41: #{dual_systems_forward.1} parent=1 // pred_fallthru
      _
    // Predicated region
    $region42: #{dual_systems_forward.1} parent=1 // pred_check
      _
    $region43: #{dual_systems_forward.1} parent=1 // pred_check_branch
      %591 = sbr.rel (0) target = $region45
    $region44: #{dual_systems_forward.1} parent=1 // pred_region
      _
    $region45: #{dual_systems_forward.1} parent=1 // pred_fallthru
      _
    // Predicated region
    $region46: #{dual_systems_forward.1} parent=1 // pred_check
      _
    $region47: #{dual_systems_forward.1} parent=1 // pred_check_branch
      %593 = sbr.rel (0) target = $region49
    $region48: #{dual_systems_forward.1} parent=1 // pred_region
      _
    $region49: #{dual_systems_forward.1} parent=1 // pred_fallthru
      _
    // Predicated region
    $region50: #{dual_systems_forward.1} parent=1 // pred_check
      _
    $region51: #{dual_systems_forward.1} parent=1 // pred_check_branch
      %595 = sbr.rel (0) target = $region53
    $region52: #{dual_systems_forward.1} parent=1 // pred_region
      _
    $region53: #{dual_systems_forward.1} parent=1 // pred_fallthru
      _
    // Predicated region
    $region54: #{dual_systems_forward.1} parent=1 // pred_check
      _
    $region55: #{dual_systems_forward.1} parent=1 // pred_check_branch
      %597 = sbr.rel (0) target = $region57
    $region56: #{dual_systems_forward.1} parent=1 // pred_region
      _
    $region57: #{dual_systems_forward.1} parent=1 // pred_fallthru
      _
    // Predicated region
    $region58: #{dual_systems_forward.1} parent=1 // pred_check
      _
    $region59: #{dual_systems_forward.1} parent=1 // pred_check_branch
      %599 = sbr.rel (0) target = $region61
    $region60: #{dual_systems_forward.1} parent=1 // pred_region
      _
    $region61: #{dual_systems_forward.1} parent=1 // pred_fallthru
      _
    // Predicated region
    $region62: #{dual_systems_forward.1} parent=1 // pred_check
      _
    $region63: #{dual_systems_forward.1} parent=1 // pred_check_branch
      %601 = sbr.rel (0) target = $region65
    $region64: #{dual_systems_forward.1} parent=1 // pred_region
      _
    $region65: #{dual_systems_forward.1} parent=1 // pred_fallthru
      _
    %602 = vsyncpa [#allocation3], 1

</llo_original>
